<compile_context>
chip_gen: v7x
topology: tpu7x:2x2x1
jax: 0.10.0
libtpu: 0.0.40
codegen_flags: <defaults>
</compile_context>

<pallas_src>
import functools

import numpy as np
import jax
import jax.numpy as jnp
from jax import lax
from jax.experimental import pallas as pl
from jax.experimental.pallas import tpu as pltpu


def _tree_sum(terms):
    """Balanced-tree sum -> log-depth dependence chain (ILP for 4 VALU slots)."""
    terms = list(terms)
    while len(terms) > 1:
        nxt = [terms[i] + terms[i + 1] for i in range(0, len(terms) - 1, 2)]
        if len(terms) % 2:
            nxt.append(terms[-1])
        terms = nxt
    return terms[0]


def _optical_flow_kernel(x_ref, w1_ref, b1_ref, w2_ref, b2_ref, w3_ref, b3_ref,
                         out_ref, pad_ref, *, H, W, K, K3, Cin, Cmid, PAD,
                         inv_h, inv_w, cmin, cmax):
    HW = H * W
    NB = x_ref.shape[0]          # batch elements handled by this grid step

    # ---- hoisted constants: per-lane column index and edge masks -----------
    # Built at (1, HW) and broadcast over the batch axis.
    flat = lax.broadcasted_iota(jnp.int32, (1, HW), 1)
    if W & (W - 1) == 0:
        col = jnp.bitwise_and(flat, W - 1)        # w = flat % W (W power of 2)
    else:
        col = lax.rem(flat, W)

    mask_cache = {}

    def col_mask(ox):
        # valid target columns for horizontal tap offset ox: 0 <= w + ox < W
        lo = max(0, -ox)
        hi = W - max(0, ox)
        if lo == 0 and hi == W:
            return None
        if ox not in mask_cache:
            mask_cache[ox] = jnp.logical_and(col >= lo, col < hi)
        return mask_cache[ox]

    # ---- flat padded scratch ------------------------------------------------
    # pad_ref: (max(Cin, Cmid), NB, HW + 2*PAD).  Interior begins at lane
    # offset PAD (a multiple of 128 -> aligned, unmasked stores).  Zero the
    # two PAD-wide strips once, for all channels, with two 3-D stores; the
    # interior is always overwritten before it is read.
    C = pad_ref.shape[0]
    zeros = jnp.zeros((C, NB, PAD), jnp.float32)
    pad_ref[:, :, 0:PAD] = zeros
    pad_ref[:, :, PAD + HW:PAD + HW + PAD] = zeros

    def set_interior(planes):
        for c, p in enumerate(planes):
            pad_ref[c, :, PAD:PAD + HW] = p

    def window(c, s):
        # Plane c shifted by s elements in the flat (row-major) frame,
        # zero-filled outside the image (vertical OOB lands in the strips).
        # TODO(synk): if vld/XLU ever becomes the binding slot, load each plane
        # once and generate the +/-1 / +/-W shifts with pltpu.roll instead of
        # misaligned slices.
        return pad_ref[c, :, PAD + s:PAD + s + HW]

    def conv_same(w_ref, b_ref, cin, cout, k):
        """'same'-padded k x k conv over the planes currently in pad_ref.

        Each shifted window is loaded once and MAC'd immediately into
        per-(co, dx) accumulators, so the live set stays at ~cout*k
        accumulators + one window (no big value hoist, no vreg spills).
        """
        ph = k // 2
        acc = [[None] * k for _ in range(cout)]
        for dx in range(k):
            ox = dx - ph
            for dy in range(k):
                s = (dy - ph) * W + ox
                for ci in range(cin):
                    win = window(ci, s)
                    for co in range(cout):
                        wgt = w_ref[((co * cin + ci) * k + dy) * k + dx]
                        t = wgt * win
                        a = acc[co][dx]
                        acc[co][dx] = t if a is None else a + t
        outs = []
        for co in range(cout):
            groups = []
            for dx in range(k):
                g = acc[co][dx]
                m = col_mask(dx - ph)                 # kill wrapped-row columns
                if m is not None:
                    g = jnp.where(m, g, 0.0)
                groups.append(g)
            outs.append(b_ref[co] + _tree_sum(groups))
        return outs

    def conv_valid(w_ref, b_ref, cin, cout, k):
        """Un-padded k x k conv computed in the full HW frame.

        Positions with h >= H-k+1 or w >= W-k+1 hold garbage and are sliced
        away by the wrapper (for the PredNet config k == 1, nothing is sliced).
        """
        acc = [None] * cout
        for dy in range(k):
            for dx in range(k):
                s = dy * W + dx
                for ci in range(cin):
                    win = window(ci, s)
                    for co in range(cout):
                        wgt = w_ref[((co * cin + ci) * k + dy) * k + dx]
                        t = wgt * win
                        acc[co] = t if acc[co] is None else acc[co] + t
        return [b_ref[co] + acc[co] for co in range(cout)]

    def conv_1x1(planes, w_ref, b_ref, cin, cout):
        outs = []
        for co in range(cout):
            terms = [w_ref[co * cin + ci] * planes[ci] for ci in range(cin)]
            outs.append(b_ref[co] + _tree_sum(terms))
        return outs

    # ---- network ------------------------------------------------------------
    # conv1: input planes read directly in their natural (NB, Cin, HW) order.
    set_interior([x_ref[:, ci, :].astype(jnp.float32) for ci in range(Cin)])
    h1 = conv_same(w1_ref, b1_ref, Cin, Cmid, K)

    # conv2 (reuse the same scratch; h1 values are already materialized).
    set_interior(h1)
    # TODO(synk): at real frame sizes, tile conv2+conv3 over row blocks (extra
    # grid axis with (K//2)-row halos) instead of whole-frame flat planes, and
    # set vmem_limit_bytes explicitly (v7x has only 64 MiB of physical VMEM).
    h2 = conv_same(w2_ref, b2_ref, Cmid, Cmid, K)

    # conv3 (valid).  The module's forward only keeps output channels 0 and 1.
    if K3 == 1:
        h3 = conv_1x1(h2, w3_ref, b3_ref, Cmid, 2)
    else:
        set_interior(h2)
        h3 = conv_valid(w3_ref, b3_ref, Cmid, 2, K3)

    out_ref[:, 0, :] = jnp.clip(h3[0] * inv_h, cmin, cmax).astype(out_ref.dtype)
    out_ref[:, 1, :] = jnp.clip(h3[1] * inv_w, cmin, cmax).astype(out_ref.dtype)


def optical_flow_forward(x, params, *, height, width, clamp_min, clamp_max,
                         n_blocks=1):
    """x: (N, Cin, H, W) float32 NCHW.  Returns (N, 2, Ho, Wo) float32.

    n_blocks: number of grid steps over the batch (default 1).  Only raise it
    when per-step work is large enough to hide the ~0.35us/step grid overhead;
    splitting a trivial batch (e.g. N=2, 16x16) is a net loss.
    """
    w1, b1, w2, b2, w3, b3 = params            # PyTorch OIHW weights, (O,) biases
    N, Cin, H, W = x.shape
    Cmid = w1.shape[0]
    K = w1.shape[2]
    K3 = w3.shape[2]
    assert K % 2 == 1, "conv1/conv2 kernel must be odd for 'same' padding"
    assert Cmid >= 2, "forward uses output channels 0 and 1"
    assert N % n_blocks == 0
    HW = H * W
    Ho, Wo = H - K3 + 1, W - K3 + 1
    NB = N // n_blocks

    # Flat padding width: enough for the largest shift, rounded up to a
    # multiple of 128 so interior scratch stores land on a lane boundary.
    pad_needed = max((K // 2) * (W + 1), (K3 - 1) * (W + 1), 1)
    PAD = ((pad_needed + 127) // 128) * 128
    HWp = HW + 2 * PAD

    # Pure reshapes only (no transposes, no extra HBM pass).
    x_flat = x.reshape(N, Cin, HW)

    kernel = functools.partial(
        _optical_flow_kernel, H=H, W=W, K=K, K3=K3, Cin=Cin, Cmid=Cmid, PAD=PAD,
        inv_h=2.0 / float(height), inv_w=2.0 / float(width),
        cmin=float(clamp_min), cmax=float(clamp_max))

    smem = pl.BlockSpec(memory_space=pltpu.MemorySpace.SMEM)

    out_flat = pl.pallas_call(
        kernel,
        out_shape=jax.ShapeDtypeStruct((N, 2, HW), x.dtype),
        grid_spec=pltpu.PrefetchScalarGridSpec(
            num_scalar_prefetch=0,
            grid=(n_blocks,),
            in_specs=[
                pl.BlockSpec((NB, Cin, HW), lambda b: (b, 0, 0)),
                smem, smem, smem, smem, smem, smem,
            ],
            out_specs=pl.BlockSpec((NB, 2, HW), lambda b: (b, 0, 0)),
            scratch_shapes=[pltpu.VMEM((max(Cin, Cmid), NB, HWp), jnp.float32)],
        ),
        # Single step (or a sequential batch loop).  TODO(synk): when the batch
        # is large enough to warrant the second TensorCore on v7x, use
        # pltpu.CORE_PARALLEL on a real batch axis instead of plain "parallel".
        compiler_params=pltpu.CompilerParams(
            dimension_semantics=("arbitrary",)),
    )(x_flat,
      w1.reshape(-1).astype(jnp.float32), b1.reshape(-1).astype(jnp.float32),
      w2.reshape(-1).astype(jnp.float32), b2.reshape(-1).astype(jnp.float32),
      w3.reshape(-1).astype(jnp.float32), b3.reshape(-1).astype(jnp.float32))

    out = out_flat.reshape(N, 2, H, W)
    if Ho != H or Wo != W:
        out = out[:, :, :Ho, :Wo]
    return out


def _ref_forward(x, params, *, height, width, clamp_min, clamp_max):
    """Pure-JAX reference of OpticalFlow.forward (NCHW, OIHW)."""
    w1, b1, w2, b2, w3, b3 = params
    dn = ('NCHW', 'OIHW', 'NCHW')
    P = w1.shape[2] // 2

    def conv(h, w, b, pad):
        y = lax.conv_general_dilated(h, w, (1, 1), [(pad, pad), (pad, pad)],
                                     dimension_numbers=dn)
        return y + b.reshape(1, -1, 1, 1)

    h = conv(x, w1, b1, P)
    h = conv(h, w2, b2, P)
    h = conv(h, w3, b3, 0)
    out = jnp.stack([h[:, 0] * (2.0 / height), h[:, 1] * (2.0 / width)], axis=1)
    return jnp.clip(out, clamp_min, clamp_max)


def init_params(key, channel_in, channel_out, kernel_size):
    """Deterministic re-implementation of OpticalFlow.init_weight_bias."""
    k1, k2, k3, k4 = jax.random.split(key, 4)
    K = kernel_size[0]

    # conv1: xavier_normal weight, default-uniform bias
    fan_in1 = channel_in * K * K
    fan_out1 = channel_out * K * K
    std1 = float(np.sqrt(2.0 / (fan_in1 + fan_out1)))
    w1 = std1 * jax.random.normal(k1, (channel_out, channel_in, K, K), jnp.float32)
    bound1 = float(1.0 / np.sqrt(fan_in1))
    b1 = jax.random.uniform(k2, (channel_out,), jnp.float32, -bound1, bound1)

    # conv2: xavier_normal weight, default-uniform bias
    fan_in2 = channel_out * K * K
    fan_out2 = channel_out * K * K
    std2 = float(np.sqrt(2.0 / (fan_in2 + fan_out2)))
    w2 = std2 * jax.random.normal(k3, (channel_out, channel_out, K, K), jnp.float32)
    bound2 = float(1.0 / np.sqrt(fan_in2))
    b2 = jax.random.uniform(k4, (channel_out,), jnp.float32, -bound2, bound2)

    # conv3: weights and bias filled with zero (per init_weight_bias)
    K3 = kernel_size[1]
    w3 = jnp.zeros((channel_out, channel_out, K3, K3), jnp.float32)
    b3 = jnp.zeros((channel_out,), jnp.float32)
    return (w1, b1, w2, b2, w3, b3)


if __name__ == "__main__":
    key = jax.random.PRNGKey(0)
    N, Cin, H, Wd = 2, 4, 16, 16
    channel_out = 2
    kernel_size = (3, 1)
    clamp_min, clamp_max = -1.0, 1.0
    size = (H, Wd)                     # (height, width) used for flow scaling

    kx, kp, kc = jax.random.split(key, 3)
    x = jax.random.normal(kx, (N, Cin, H, Wd), jnp.float32)

    # Sanity check of the kernel against a pure-JAX reference, using non-zero
    # conv3 parameters so the comparison is non-trivial.
    w1, b1, w2, b2, _, _ = init_params(kp, Cin, channel_out, kernel_size)
    kc1, kc2 = jax.random.split(kc)
    w3c = 0.1 * jax.random.normal(kc1, (channel_out, channel_out, 1, 1), jnp.float32)
    b3c = 0.1 * jax.random.normal(kc2, (channel_out,), jnp.float32)
    chk_params = (w1, b1, w2, b2, w3c, b3c)
    got = optical_flow_forward(x, chk_params, height=size[0], width=size[1],
                               clamp_min=clamp_min, clamp_max=clamp_max)
    want = _ref_forward(x, chk_params, height=size[0], width=size[1],
                        clamp_min=clamp_min, clamp_max=clamp_max)
    np.testing.assert_allclose(np.asarray(got), np.asarray(want),
                               rtol=2e-4, atol=2e-5)

    # Module-faithful run (conv3 weights/bias are zero, as in init_weight_bias).
    params = init_params(kp, Cin, channel_out, kernel_size)
    out = optical_flow_forward(x, params, height=size[0], width=size[1],
                               clamp_min=clamp_min, clamp_max=clamp_max)
    jax.block_until_ready(out)
    assert out.shape == (N, 2, H, Wd)
    print("KERNEL_OK")
</pallas_src>

<mosaic_0001>
module attributes {stable_mosaic.version = 11 : i64} {
  func.func @_optical_flow_kernel(%arg0: i32, %arg1: memref<2x4x256xf32, #tpu.memory_space<vmem>>, %arg2: memref<72xf32, #tpu.memory_space<smem>>, %arg3: memref<2xf32, #tpu.memory_space<smem>>, %arg4: memref<36xf32, #tpu.memory_space<smem>>, %arg5: memref<2xf32, #tpu.memory_space<smem>>, %arg6: memref<4xf32, #tpu.memory_space<smem>>, %arg7: memref<2xf32, #tpu.memory_space<smem>>, %arg8: memref<2x2x256xf32, #tpu.memory_space<vmem>>, %arg9: memref<4x2x512xf32, #tpu.memory_space<vmem>>) attributes {dimension_semantics = [#tpu.dimension_semantics<arbitrary>], iteration_bounds = array<i64: 1>, scalar_prefetch = 0 : i64, scratch_operands = 1 : i64, tpu.core_type = #tpu.core_type<tc>, window_params = [{transform_indices = @transform_0, window_bounds = array<i64: 2, 4, 256>}, {transform_indices = @transform_1, window_bounds = array<i64: 72>}, {transform_indices = @transform_2, window_bounds = array<i64: 2>}, {transform_indices = @transform_3, window_bounds = array<i64: 36>}, {transform_indices = @transform_4, window_bounds = array<i64: 2>}, {transform_indices = @transform_5, window_bounds = array<i64: 4>}, {transform_indices = @transform_6, window_bounds = array<i64: 2>}, {transform_indices = @transform_7, window_bounds = array<i64: 2, 2, 256>}]} {
    %0 = tpu.iota {dimensions = array<i32: 1>} : vector<1x256xi32>
    %c15_i32 = arith.constant 15 : i32
    %1 = vector.broadcast %c15_i32 : i32 to vector<1x256xi32>
    %2 = arith.andi %0, %1 : vector<1x256xi32>
    %cst = arith.constant 0.000000e+00 : f32
    %3 = vector.broadcast %cst : f32 to vector<4x2x128xf32>
    %c0 = arith.constant 0 : index
    %c0_0 = arith.constant 0 : index
    %c0_1 = arith.constant 0 : index
    %4 = vector.load %arg9[%c0, %c0_0, %c0_1] : memref<4x2x512xf32, #tpu.memory_space<vmem>>, vector<4x2x128xf32>
    tpu.vector_store %arg9[%c0, %c0_0, %c0_1], %3 {strides = array<i32>} : memref<4x2x512xf32, #tpu.memory_space<vmem>>, vector<4x2x128xf32>,
    %c0_2 = arith.constant 0 : index
    %c0_3 = arith.constant 0 : index
    %c384 = arith.constant 384 : index
    %5 = vector.load %arg9[%c0_2, %c0_3, %c384] : memref<4x2x512xf32, #tpu.memory_space<vmem>>, vector<4x2x128xf32>
    tpu.vector_store %arg9[%c0_2, %c0_3, %c384], %3 {strides = array<i32>} : memref<4x2x512xf32, #tpu.memory_space<vmem>>, vector<4x2x128xf32>,
    %c0_4 = arith.constant 0 : index
    %c0_5 = arith.constant 0 : index
    %c0_6 = arith.constant 0 : index
    %6 = vector.load %arg1[%c0_4, %c0_5, %c0_6] : memref<2x4x256xf32, #tpu.memory_space<vmem>>, vector<2x1x256xf32>
    %7 = vector.shape_cast %6 : vector<2x1x256xf32> to vector<2x256xf32>
    %c0_7 = arith.constant 0 : index
    %c1 = arith.constant 1 : index
    %c0_8 = arith.constant 0 : index
    %8 = vector.load %arg1[%c0_7, %c1, %c0_8] : memref<2x4x256xf32, #tpu.memory_space<vmem>>, vector<2x1x256xf32>
    %9 = vector.shape_cast %8 : vector<2x1x256xf32> to vector<2x256xf32>
    %c0_9 = arith.constant 0 : index
    %c2 = arith.constant 2 : index
    %c0_10 = arith.constant 0 : index
    %10 = vector.load %arg1[%c0_9, %c2, %c0_10] : memref<2x4x256xf32, #tpu.memory_space<vmem>>, vector<2x1x256xf32>
    %11 = vector.shape_cast %10 : vector<2x1x256xf32> to vector<2x256xf32>
    %c0_11 = arith.constant 0 : index
    %c3 = arith.constant 3 : index
    %c0_12 = arith.constant 0 : index
    %12 = vector.load %arg1[%c0_11, %c3, %c0_12] : memref<2x4x256xf32, #tpu.memory_space<vmem>>, vector<2x1x256xf32>
    %13 = vector.shape_cast %12 : vector<2x1x256xf32> to vector<2x256xf32>
    %c0_13 = arith.constant 0 : index
    %c0_14 = arith.constant 0 : index
    %c128 = arith.constant 128 : index
    %14 = vector.load %arg9[%c0_13, %c0_14, %c128] : memref<4x2x512xf32, #tpu.memory_space<vmem>>, vector<1x2x256xf32>
    %15 = vector.shape_cast %14 : vector<1x2x256xf32> to vector<2x256xf32>
    %16 = vector.shape_cast %7 : vector<2x256xf32> to vector<1x2x256xf32>
    tpu.vector_store %arg9[%c0_13, %c0_14, %c128], %16 {strides = array<i32>} : memref<4x2x512xf32, #tpu.memory_space<vmem>>, vector<1x2x256xf32>,
    %c1_15 = arith.constant 1 : index
    %c0_16 = arith.constant 0 : index
    %c128_17 = arith.constant 128 : index
    %17 = vector.load %arg9[%c1_15, %c0_16, %c128_17] : memref<4x2x512xf32, #tpu.memory_space<vmem>>, vector<1x2x256xf32>
    %18 = vector.shape_cast %17 : vector<1x2x256xf32> to vector<2x256xf32>
    %19 = vector.shape_cast %9 : vector<2x256xf32> to vector<1x2x256xf32>
    tpu.vector_store %arg9[%c1_15, %c0_16, %c128_17], %19 {strides = array<i32>} : memref<4x2x512xf32, #tpu.memory_space<vmem>>, vector<1x2x256xf32>,
    %c2_18 = arith.constant 2 : index
    %c0_19 = arith.constant 0 : index
    %c128_20 = arith.constant 128 : index
    %20 = vector.load %arg9[%c2_18, %c0_19, %c128_20] : memref<4x2x512xf32, #tpu.memory_space<vmem>>, vector<1x2x256xf32>
    %21 = vector.shape_cast %20 : vector<1x2x256xf32> to vector<2x256xf32>
    %22 = vector.shape_cast %11 : vector<2x256xf32> to vector<1x2x256xf32>
    tpu.vector_store %arg9[%c2_18, %c0_19, %c128_20], %22 {strides = array<i32>} : memref<4x2x512xf32, #tpu.memory_space<vmem>>, vector<1x2x256xf32>,
    %c3_21 = arith.constant 3 : index
    %c0_22 = arith.constant 0 : index
    %c128_23 = arith.constant 128 : index
    %23 = vector.load %arg9[%c3_21, %c0_22, %c128_23] : memref<4x2x512xf32, #tpu.memory_space<vmem>>, vector<1x2x256xf32>
    %24 = vector.shape_cast %23 : vector<1x2x256xf32> to vector<2x256xf32>
    %25 = vector.shape_cast %13 : vector<2x256xf32> to vector<1x2x256xf32>
    tpu.vector_store %arg9[%c3_21, %c0_22, %c128_23], %25 {strides = array<i32>} : memref<4x2x512xf32, #tpu.memory_space<vmem>>, vector<1x2x256xf32>,
    %c0_24 = arith.constant 0 : index
    %c0_25 = arith.constant 0 : index
    %c111 = arith.constant 111 : index
    %26 = vector.load %arg9[%c0_24, %c0_25, %c111] : memref<4x2x512xf32, #tpu.memory_space<vmem>>, vector<1x2x256xf32>
    %27 = vector.shape_cast %26 : vector<1x2x256xf32> to vector<2x256xf32>
    %c0_26 = arith.constant 0 : index
    %28 = memref.load %arg2[%c0_26] : memref<72xf32, #tpu.memory_space<smem>>
    %29 = vector.broadcast %28 : f32 to vector<2x256xf32>
    %30 = arith.mulf %29, %27 : vector<2x256xf32>
    %c36 = arith.constant 36 : index
    %31 = memref.load %arg2[%c36] : memref<72xf32, #tpu.memory_space<smem>>
    %32 = vector.broadcast %31 : f32 to vector<2x256xf32>
    %33 = arith.mulf %32, %27 : vector<2x256xf32>
    %c1_27 = arith.constant 1 : index
    %c0_28 = arith.constant 0 : index
    %c111_29 = arith.constant 111 : index
    %34 = vector.load %arg9[%c1_27, %c0_28, %c111_29] : memref<4x2x512xf32, #tpu.memory_space<vmem>>, vector<1x2x256xf32>
    %35 = vector.shape_cast %34 : vector<1x2x256xf32> to vector<2x256xf32>
    %c9 = arith.constant 9 : index
    %36 = memref.load %arg2[%c9] : memref<72xf32, #tpu.memory_space<smem>>
    %37 = vector.broadcast %36 : f32 to vector<2x256xf32>
    %38 = arith.mulf %37, %35 : vector<2x256xf32>
    %39 = arith.addf %30, %38 : vector<2x256xf32>
    %c45 = arith.constant 45 : index
    %40 = memref.load %arg2[%c45] : memref<72xf32, #tpu.memory_space<smem>>
    %41 = vector.broadcast %40 : f32 to vector<2x256xf32>
    %42 = arith.mulf %41, %35 : vector<2x256xf32>
    %43 = arith.addf %33, %42 : vector<2x256xf32>
    %c2_30 = arith.constant 2 : index
    %c0_31 = arith.constant 0 : index
    %c111_32 = arith.constant 111 : index
    %44 = vector.load %arg9[%c2_30, %c0_31, %c111_32] : memref<4x2x512xf32, #tpu.memory_space<vmem>>, vector<1x2x256xf32>
    %45 = vector.shape_cast %44 : vector<1x2x256xf32> to vector<2x256xf32>
    %c18 = arith.constant 18 : index
    %46 = memref.load %arg2[%c18] : memref<72xf32, #tpu.memory_space<smem>>
    %47 = vector.broadcast %46 : f32 to vector<2x256xf32>
    %48 = arith.mulf %47, %45 : vector<2x256xf32>
    %49 = arith.addf %39, %48 : vector<2x256xf32>
    %c54 = arith.constant 54 : index
    %50 = memref.load %arg2[%c54] : memref<72xf32, #tpu.memory_space<smem>>
    %51 = vector.broadcast %50 : f32 to vector<2x256xf32>
    %52 = arith.mulf %51, %45 : vector<2x256xf32>
    %53 = arith.addf %43, %52 : vector<2x256xf32>
    %c3_33 = arith.constant 3 : index
    %c0_34 = arith.constant 0 : index
    %c111_35 = arith.constant 111 : index
    %54 = vector.load %arg9[%c3_33, %c0_34, %c111_35] : memref<4x2x512xf32, #tpu.memory_space<vmem>>, vector<1x2x256xf32>
    %55 = vector.shape_cast %54 : vector<1x2x256xf32> to vector<2x256xf32>
    %c27 = arith.constant 27 : index
    %56 = memref.load %arg2[%c27] : memref<72xf32, #tpu.memory_space<smem>>
    %57 = vector.broadcast %56 : f32 to vector<2x256xf32>
    %58 = arith.mulf %57, %55 : vector<2x256xf32>
    %59 = arith.addf %49, %58 : vector<2x256xf32>
    %c63 = arith.constant 63 : index
    %60 = memref.load %arg2[%c63] : memref<72xf32, #tpu.memory_space<smem>>
    %61 = vector.broadcast %60 : f32 to vector<2x256xf32>
    %62 = arith.mulf %61, %55 : vector<2x256xf32>
    %63 = arith.addf %53, %62 : vector<2x256xf32>
    %c0_36 = arith.constant 0 : index
    %c0_37 = arith.constant 0 : index
    %c127 = arith.constant 127 : index
    %64 = vector.load %arg9[%c0_36, %c0_37, %c127] : memref<4x2x512xf32, #tpu.memory_space<vmem>>, vector<1x2x256xf32>
    %65 = vector.shape_cast %64 : vector<1x2x256xf32> to vector<2x256xf32>
    %c3_38 = arith.constant 3 : index
    %66 = memref.load %arg2[%c3_38] : memref<72xf32, #tpu.memory_space<smem>>
    %67 = vector.broadcast %66 : f32 to vector<2x256xf32>
    %68 = arith.mulf %67, %65 : vector<2x256xf32>
    %69 = arith.addf %59, %68 : vector<2x256xf32>
    %c39 = arith.constant 39 : index
    %70 = memref.load %arg2[%c39] : memref<72xf32, #tpu.memory_space<smem>>
    %71 = vector.broadcast %70 : f32 to vector<2x256xf32>
    %72 = arith.mulf %71, %65 : vector<2x256xf32>
    %73 = arith.addf %63, %72 : vector<2x256xf32>
    %c1_39 = arith.constant 1 : index
    %c0_40 = arith.constant 0 : index
    %c127_41 = arith.constant 127 : index
    %74 = vector.load %arg9[%c1_39, %c0_40, %c127_41] : memref<4x2x512xf32, #tpu.memory_space<vmem>>, vector<1x2x256xf32>
    %75 = vector.shape_cast %74 : vector<1x2x256xf32> to vector<2x256xf32>
    %c12 = arith.constant 12 : index
    %76 = memref.load %arg2[%c12] : memref<72xf32, #tpu.memory_space<smem>>
    %77 = vector.broadcast %76 : f32 to vector<2x256xf32>
    %78 = arith.mulf %77, %75 : vector<2x256xf32>
    %79 = arith.addf %69, %78 : vector<2x256xf32>
    %c48 = arith.constant 48 : index
    %80 = memref.load %arg2[%c48] : memref<72xf32, #tpu.memory_space<smem>>
    %81 = vector.broadcast %80 : f32 to vector<2x256xf32>
    %82 = arith.mulf %81, %75 : vector<2x256xf32>
    %83 = arith.addf %73, %82 : vector<2x256xf32>
    %c2_42 = arith.constant 2 : index
    %c0_43 = arith.constant 0 : index
    %c127_44 = arith.constant 127 : index
    %84 = vector.load %arg9[%c2_42, %c0_43, %c127_44] : memref<4x2x512xf32, #tpu.memory_space<vmem>>, vector<1x2x256xf32>
    %85 = vector.shape_cast %84 : vector<1x2x256xf32> to vector<2x256xf32>
    %c21 = arith.constant 21 : index
    %86 = memref.load %arg2[%c21] : memref<72xf32, #tpu.memory_space<smem>>
    %87 = vector.broadcast %86 : f32 to vector<2x256xf32>
    %88 = arith.mulf %87, %85 : vector<2x256xf32>
    %89 = arith.addf %79, %88 : vector<2x256xf32>
    %c57 = arith.constant 57 : index
    %90 = memref.load %arg2[%c57] : memref<72xf32, #tpu.memory_space<smem>>
    %91 = vector.broadcast %90 : f32 to vector<2x256xf32>
    %92 = arith.mulf %91, %85 : vector<2x256xf32>
    %93 = arith.addf %83, %92 : vector<2x256xf32>
    %c3_45 = arith.constant 3 : index
    %c0_46 = arith.constant 0 : index
    %c127_47 = arith.constant 127 : index
    %94 = vector.load %arg9[%c3_45, %c0_46, %c127_47] : memref<4x2x512xf32, #tpu.memory_space<vmem>>, vector<1x2x256xf32>
    %95 = vector.shape_cast %94 : vector<1x2x256xf32> to vector<2x256xf32>
    %c30 = arith.constant 30 : index
    %96 = memref.load %arg2[%c30] : memref<72xf32, #tpu.memory_space<smem>>
    %97 = vector.broadcast %96 : f32 to vector<2x256xf32>
    %98 = arith.mulf %97, %95 : vector<2x256xf32>
    %99 = arith.addf %89, %98 : vector<2x256xf32>
    %c66 = arith.constant 66 : index
    %100 = memref.load %arg2[%c66] : memref<72xf32, #tpu.memory_space<smem>>
    %101 = vector.broadcast %100 : f32 to vector<2x256xf32>
    %102 = arith.mulf %101, %95 : vector<2x256xf32>
    %103 = arith.addf %93, %102 : vector<2x256xf32>
    %c0_48 = arith.constant 0 : index
    %c0_49 = arith.constant 0 : index
    %c143 = arith.constant 143 : index
    %104 = vector.load %arg9[%c0_48, %c0_49, %c143] : memref<4x2x512xf32, #tpu.memory_space<vmem>>, vector<1x2x256xf32>
    %105 = vector.shape_cast %104 : vector<1x2x256xf32> to vector<2x256xf32>
    %c6 = arith.constant 6 : index
    %106 = memref.load %arg2[%c6] : memref<72xf32, #tpu.memory_space<smem>>
    %107 = vector.broadcast %106 : f32 to vector<2x256xf32>
    %108 = arith.mulf %107, %105 : vector<2x256xf32>
    %109 = arith.addf %99, %108 : vector<2x256xf32>
    %c42 = arith.constant 42 : index
    %110 = memref.load %arg2[%c42] : memref<72xf32, #tpu.memory_space<smem>>
    %111 = vector.broadcast %110 : f32 to vector<2x256xf32>
    %112 = arith.mulf %111, %105 : vector<2x256xf32>
    %113 = arith.addf %103, %112 : vector<2x256xf32>
    %c1_50 = arith.constant 1 : index
    %c0_51 = arith.constant 0 : index
    %c143_52 = arith.constant 143 : index
    %114 = vector.load %arg9[%c1_50, %c0_51, %c143_52] : memref<4x2x512xf32, #tpu.memory_space<vmem>>, vector<1x2x256xf32>
    %115 = vector.shape_cast %114 : vector<1x2x256xf32> to vector<2x256xf32>
    %c15 = arith.constant 15 : index
    %116 = memref.load %arg2[%c15] : memref<72xf32, #tpu.memory_space<smem>>
    %117 = vector.broadcast %116 : f32 to vector<2x256xf32>
    %118 = arith.mulf %117, %115 : vector<2x256xf32>
    %119 = arith.addf %109, %118 : vector<2x256xf32>
    %c51 = arith.constant 51 : index
    %120 = memref.load %arg2[%c51] : memref<72xf32, #tpu.memory_space<smem>>
    %121 = vector.broadcast %120 : f32 to vector<2x256xf32>
    %122 = arith.mulf %121, %115 : vector<2x256xf32>
    %123 = arith.addf %113, %122 : vector<2x256xf32>
    %c2_53 = arith.constant 2 : index
    %c0_54 = arith.constant 0 : index
    %c143_55 = arith.constant 143 : index
    %124 = vector.load %arg9[%c2_53, %c0_54, %c143_55] : memref<4x2x512xf32, #tpu.memory_space<vmem>>, vector<1x2x256xf32>
    %125 = vector.shape_cast %124 : vector<1x2x256xf32> to vector<2x256xf32>
    %c24 = arith.constant 24 : index
    %126 = memref.load %arg2[%c24] : memref<72xf32, #tpu.memory_space<smem>>
    %127 = vector.broadcast %126 : f32 to vector<2x256xf32>
    %128 = arith.mulf %127, %125 : vector<2x256xf32>
    %129 = arith.addf %119, %128 : vector<2x256xf32>
    %c60 = arith.constant 60 : index
    %130 = memref.load %arg2[%c60] : memref<72xf32, #tpu.memory_space<smem>>
    %131 = vector.broadcast %130 : f32 to vector<2x256xf32>
    %132 = arith.mulf %131, %125 : vector<2x256xf32>
    %133 = arith.addf %123, %132 : vector<2x256xf32>
    %c3_56 = arith.constant 3 : index
    %c0_57 = arith.constant 0 : index
    %c143_58 = arith.constant 143 : index
    %134 = vector.load %arg9[%c3_56, %c0_57, %c143_58] : memref<4x2x512xf32, #tpu.memory_space<vmem>>, vector<1x2x256xf32>
    %135 = vector.shape_cast %134 : vector<1x2x256xf32> to vector<2x256xf32>
    %c33 = arith.constant 33 : index
    %136 = memref.load %arg2[%c33] : memref<72xf32, #tpu.memory_space<smem>>
    %137 = vector.broadcast %136 : f32 to vector<2x256xf32>
    %138 = arith.mulf %137, %135 : vector<2x256xf32>
    %139 = arith.addf %129, %138 : vector<2x256xf32>
    %c69 = arith.constant 69 : index
    %140 = memref.load %arg2[%c69] : memref<72xf32, #tpu.memory_space<smem>>
    %141 = vector.broadcast %140 : f32 to vector<2x256xf32>
    %142 = arith.mulf %141, %135 : vector<2x256xf32>
    %143 = arith.addf %133, %142 : vector<2x256xf32>
    %c0_59 = arith.constant 0 : index
    %c0_60 = arith.constant 0 : index
    %c112 = arith.constant 112 : index
    %144 = vector.load %arg9[%c0_59, %c0_60, %c112] : memref<4x2x512xf32, #tpu.memory_space<vmem>>, vector<1x2x256xf32>
    %145 = vector.shape_cast %144 : vector<1x2x256xf32> to vector<2x256xf32>
    %c1_61 = arith.constant 1 : index
    %146 = memref.load %arg2[%c1_61] : memref<72xf32, #tpu.memory_space<smem>>
    %147 = vector.broadcast %146 : f32 to vector<2x256xf32>
    %148 = arith.mulf %147, %145 : vector<2x256xf32>
    %c37 = arith.constant 37 : index
    %149 = memref.load %arg2[%c37] : memref<72xf32, #tpu.memory_space<smem>>
    %150 = vector.broadcast %149 : f32 to vector<2x256xf32>
    %151 = arith.mulf %150, %145 : vector<2x256xf32>
    %c1_62 = arith.constant 1 : index
    %c0_63 = arith.constant 0 : index
    %c112_64 = arith.constant 112 : index
    %152 = vector.load %arg9[%c1_62, %c0_63, %c112_64] : memref<4x2x512xf32, #tpu.memory_space<vmem>>, vector<1x2x256xf32>
    %153 = vector.shape_cast %152 : vector<1x2x256xf32> to vector<2x256xf32>
    %c10 = arith.constant 10 : index
    %154 = memref.load %arg2[%c10] : memref<72xf32, #tpu.memory_space<smem>>
    %155 = vector.broadcast %154 : f32 to vector<2x256xf32>
    %156 = arith.mulf %155, %153 : vector<2x256xf32>
    %157 = arith.addf %148, %156 : vector<2x256xf32>
    %c46 = arith.constant 46 : index
    %158 = memref.load %arg2[%c46] : memref<72xf32, #tpu.memory_space<smem>>
    %159 = vector.broadcast %158 : f32 to vector<2x256xf32>
    %160 = arith.mulf %159, %153 : vector<2x256xf32>
    %161 = arith.addf %151, %160 : vector<2x256xf32>
    %c2_65 = arith.constant 2 : index
    %c0_66 = arith.constant 0 : index
    %c112_67 = arith.constant 112 : index
    %162 = vector.load %arg9[%c2_65, %c0_66, %c112_67] : memref<4x2x512xf32, #tpu.memory_space<vmem>>, vector<1x2x256xf32>
    %163 = vector.shape_cast %162 : vector<1x2x256xf32> to vector<2x256xf32>
    %c19 = arith.constant 19 : index
    %164 = memref.load %arg2[%c19] : memref<72xf32, #tpu.memory_space<smem>>
    %165 = vector.broadcast %164 : f32 to vector<2x256xf32>
    %166 = arith.mulf %165, %163 : vector<2x256xf32>
    %167 = arith.addf %157, %166 : vector<2x256xf32>
    %c55 = arith.constant 55 : index
    %168 = memref.load %arg2[%c55] : memref<72xf32, #tpu.memory_space<smem>>
    %169 = vector.broadcast %168 : f32 to vector<2x256xf32>
    %170 = arith.mulf %169, %163 : vector<2x256xf32>
    %171 = arith.addf %161, %170 : vector<2x256xf32>
    %c3_68 = arith.constant 3 : index
    %c0_69 = arith.constant 0 : index
    %c112_70 = arith.constant 112 : index
    %172 = vector.load %arg9[%c3_68, %c0_69, %c112_70] : memref<4x2x512xf32, #tpu.memory_space<vmem>>, vector<1x2x256xf32>
    %173 = vector.shape_cast %172 : vector<1x2x256xf32> to vector<2x256xf32>
    %c28 = arith.constant 28 : index
    %174 = memref.load %arg2[%c28] : memref<72xf32, #tpu.memory_space<smem>>
    %175 = vector.broadcast %174 : f32 to vector<2x256xf32>
    %176 = arith.mulf %175, %173 : vector<2x256xf32>
    %177 = arith.addf %167, %176 : vector<2x256xf32>
    %c64 = arith.constant 64 : index
    %178 = memref.load %arg2[%c64] : memref<72xf32, #tpu.memory_space<smem>>
    %179 = vector.broadcast %178 : f32 to vector<2x256xf32>
    %180 = arith.mulf %179, %173 : vector<2x256xf32>
    %181 = arith.addf %171, %180 : vector<2x256xf32>
    %c0_71 = arith.constant 0 : index
    %c0_72 = arith.constant 0 : index
    %c128_73 = arith.constant 128 : index
    %182 = vector.load %arg9[%c0_71, %c0_72, %c128_73] : memref<4x2x512xf32, #tpu.memory_space<vmem>>, vector<1x2x256xf32>
    %183 = vector.shape_cast %182 : vector<1x2x256xf32> to vector<2x256xf32>
    %c4 = arith.constant 4 : index
    %184 = memref.load %arg2[%c4] : memref<72xf32, #tpu.memory_space<smem>>
    %185 = vector.broadcast %184 : f32 to vector<2x256xf32>
    %186 = arith.mulf %185, %183 : vector<2x256xf32>
    %187 = arith.addf %177, %186 : vector<2x256xf32>
    %c40 = arith.constant 40 : index
    %188 = memref.load %arg2[%c40] : memref<72xf32, #tpu.memory_space<smem>>
    %189 = vector.broadcast %188 : f32 to vector<2x256xf32>
    %190 = arith.mulf %189, %183 : vector<2x256xf32>
    %191 = arith.addf %181, %190 : vector<2x256xf32>
    %c1_74 = arith.constant 1 : index
    %c0_75 = arith.constant 0 : index
    %c128_76 = arith.constant 128 : index
    %192 = vector.load %arg9[%c1_74, %c0_75, %c128_76] : memref<4x2x512xf32, #tpu.memory_space<vmem>>, vector<1x2x256xf32>
    %193 = vector.shape_cast %192 : vector<1x2x256xf32> to vector<2x256xf32>
    %c13 = arith.constant 13 : index
    %194 = memref.load %arg2[%c13] : memref<72xf32, #tpu.memory_space<smem>>
    %195 = vector.broadcast %194 : f32 to vector<2x256xf32>
    %196 = arith.mulf %195, %193 : vector<2x256xf32>
    %197 = arith.addf %187, %196 : vector<2x256xf32>
    %c49 = arith.constant 49 : index
    %198 = memref.load %arg2[%c49] : memref<72xf32, #tpu.memory_space<smem>>
    %199 = vector.broadcast %198 : f32 to vector<2x256xf32>
    %200 = arith.mulf %199, %193 : vector<2x256xf32>
    %201 = arith.addf %191, %200 : vector<2x256xf32>
    %c2_77 = arith.constant 2 : index
    %c0_78 = arith.constant 0 : index
    %c128_79 = arith.constant 128 : index
    %202 = vector.load %arg9[%c2_77, %c0_78, %c128_79] : memref<4x2x512xf32, #tpu.memory_space<vmem>>, vector<1x2x256xf32>
    %203 = vector.shape_cast %202 : vector<1x2x256xf32> to vector<2x256xf32>
    %c22 = arith.constant 22 : index
    %204 = memref.load %arg2[%c22] : memref<72xf32, #tpu.memory_space<smem>>
    %205 = vector.broadcast %204 : f32 to vector<2x256xf32>
    %206 = arith.mulf %205, %203 : vector<2x256xf32>
    %207 = arith.addf %197, %206 : vector<2x256xf32>
    %c58 = arith.constant 58 : index
    %208 = memref.load %arg2[%c58] : memref<72xf32, #tpu.memory_space<smem>>
    %209 = vector.broadcast %208 : f32 to vector<2x256xf32>
    %210 = arith.mulf %209, %203 : vector<2x256xf32>
    %211 = arith.addf %201, %210 : vector<2x256xf32>
    %c3_80 = arith.constant 3 : index
    %c0_81 = arith.constant 0 : index
    %c128_82 = arith.constant 128 : index
    %212 = vector.load %arg9[%c3_80, %c0_81, %c128_82] : memref<4x2x512xf32, #tpu.memory_space<vmem>>, vector<1x2x256xf32>
    %213 = vector.shape_cast %212 : vector<1x2x256xf32> to vector<2x256xf32>
    %c31 = arith.constant 31 : index
    %214 = memref.load %arg2[%c31] : memref<72xf32, #tpu.memory_space<smem>>
    %215 = vector.broadcast %214 : f32 to vector<2x256xf32>
    %216 = arith.mulf %215, %213 : vector<2x256xf32>
    %217 = arith.addf %207, %216 : vector<2x256xf32>
    %c67 = arith.constant 67 : index
    %218 = memref.load %arg2[%c67] : memref<72xf32, #tpu.memory_space<smem>>
    %219 = vector.broadcast %218 : f32 to vector<2x256xf32>
    %220 = arith.mulf %219, %213 : vector<2x256xf32>
    %221 = arith.addf %211, %220 : vector<2x256xf32>
    %c0_83 = arith.constant 0 : index
    %c0_84 = arith.constant 0 : index
    %c144 = arith.constant 144 : index
    %222 = vector.load %arg9[%c0_83, %c0_84, %c144] : memref<4x2x512xf32, #tpu.memory_space<vmem>>, vector<1x2x256xf32>
    %223 = vector.shape_cast %222 : vector<1x2x256xf32> to vector<2x256xf32>
    %c7 = arith.constant 7 : index
    %224 = memref.load %arg2[%c7] : memref<72xf32, #tpu.memory_space<smem>>
    %225 = vector.broadcast %224 : f32 to vector<2x256xf32>
    %226 = arith.mulf %225, %223 : vector<2x256xf32>
    %227 = arith.addf %217, %226 : vector<2x256xf32>
    %c43 = arith.constant 43 : index
    %228 = memref.load %arg2[%c43] : memref<72xf32, #tpu.memory_space<smem>>
    %229 = vector.broadcast %228 : f32 to vector<2x256xf32>
    %230 = arith.mulf %229, %223 : vector<2x256xf32>
    %231 = arith.addf %221, %230 : vector<2x256xf32>
    %c1_85 = arith.constant 1 : index
    %c0_86 = arith.constant 0 : index
    %c144_87 = arith.constant 144 : index
    %232 = vector.load %arg9[%c1_85, %c0_86, %c144_87] : memref<4x2x512xf32, #tpu.memory_space<vmem>>, vector<1x2x256xf32>
    %233 = vector.shape_cast %232 : vector<1x2x256xf32> to vector<2x256xf32>
    %c16 = arith.constant 16 : index
    %234 = memref.load %arg2[%c16] : memref<72xf32, #tpu.memory_space<smem>>
    %235 = vector.broadcast %234 : f32 to vector<2x256xf32>
    %236 = arith.mulf %235, %233 : vector<2x256xf32>
    %237 = arith.addf %227, %236 : vector<2x256xf32>
    %c52 = arith.constant 52 : index
    %238 = memref.load %arg2[%c52] : memref<72xf32, #tpu.memory_space<smem>>
    %239 = vector.broadcast %238 : f32 to vector<2x256xf32>
    %240 = arith.mulf %239, %233 : vector<2x256xf32>
    %241 = arith.addf %231, %240 : vector<2x256xf32>
    %c2_88 = arith.constant 2 : index
    %c0_89 = arith.constant 0 : index
    %c144_90 = arith.constant 144 : index
    %242 = vector.load %arg9[%c2_88, %c0_89, %c144_90] : memref<4x2x512xf32, #tpu.memory_space<vmem>>, vector<1x2x256xf32>
    %243 = vector.shape_cast %242 : vector<1x2x256xf32> to vector<2x256xf32>
    %c25 = arith.constant 25 : index
    %244 = memref.load %arg2[%c25] : memref<72xf32, #tpu.memory_space<smem>>
    %245 = vector.broadcast %244 : f32 to vector<2x256xf32>
    %246 = arith.mulf %245, %243 : vector<2x256xf32>
    %247 = arith.addf %237, %246 : vector<2x256xf32>
    %c61 = arith.constant 61 : index
    %248 = memref.load %arg2[%c61] : memref<72xf32, #tpu.memory_space<smem>>
    %249 = vector.broadcast %248 : f32 to vector<2x256xf32>
    %250 = arith.mulf %249, %243 : vector<2x256xf32>
    %251 = arith.addf %241, %250 : vector<2x256xf32>
    %c3_91 = arith.constant 3 : index
    %c0_92 = arith.constant 0 : index
    %c144_93 = arith.constant 144 : index
    %252 = vector.load %arg9[%c3_91, %c0_92, %c144_93] : memref<4x2x512xf32, #tpu.memory_space<vmem>>, vector<1x2x256xf32>
    %253 = vector.shape_cast %252 : vector<1x2x256xf32> to vector<2x256xf32>
    %c34 = arith.constant 34 : index
    %254 = memref.load %arg2[%c34] : memref<72xf32, #tpu.memory_space<smem>>
    %255 = vector.broadcast %254 : f32 to vector<2x256xf32>
    %256 = arith.mulf %255, %253 : vector<2x256xf32>
    %257 = arith.addf %247, %256 : vector<2x256xf32>
    %c70 = arith.constant 70 : index
    %258 = memref.load %arg2[%c70] : memref<72xf32, #tpu.memory_space<smem>>
    %259 = vector.broadcast %258 : f32 to vector<2x256xf32>
    %260 = arith.mulf %259, %253 : vector<2x256xf32>
    %261 = arith.addf %251, %260 : vector<2x256xf32>
    %c0_94 = arith.constant 0 : index
    %c0_95 = arith.constant 0 : index
    %c113 = arith.constant 113 : index
    %262 = vector.load %arg9[%c0_94, %c0_95, %c113] : memref<4x2x512xf32, #tpu.memory_space<vmem>>, vector<1x2x256xf32>
    %263 = vector.shape_cast %262 : vector<1x2x256xf32> to vector<2x256xf32>
    %c2_96 = arith.constant 2 : index
    %264 = memref.load %arg2[%c2_96] : memref<72xf32, #tpu.memory_space<smem>>
    %265 = vector.broadcast %264 : f32 to vector<2x256xf32>
    %266 = arith.mulf %265, %263 : vector<2x256xf32>
    %c38 = arith.constant 38 : index
    %267 = memref.load %arg2[%c38] : memref<72xf32, #tpu.memory_space<smem>>
    %268 = vector.broadcast %267 : f32 to vector<2x256xf32>
    %269 = arith.mulf %268, %263 : vector<2x256xf32>
    %c1_97 = arith.constant 1 : index
    %c0_98 = arith.constant 0 : index
    %c113_99 = arith.constant 113 : index
    %270 = vector.load %arg9[%c1_97, %c0_98, %c113_99] : memref<4x2x512xf32, #tpu.memory_space<vmem>>, vector<1x2x256xf32>
    %271 = vector.shape_cast %270 : vector<1x2x256xf32> to vector<2x256xf32>
    %c11 = arith.constant 11 : index
    %272 = memref.load %arg2[%c11] : memref<72xf32, #tpu.memory_space<smem>>
    %273 = vector.broadcast %272 : f32 to vector<2x256xf32>
    %274 = arith.mulf %273, %271 : vector<2x256xf32>
    %275 = arith.addf %266, %274 : vector<2x256xf32>
    %c47 = arith.constant 47 : index
    %276 = memref.load %arg2[%c47] : memref<72xf32, #tpu.memory_space<smem>>
    %277 = vector.broadcast %276 : f32 to vector<2x256xf32>
    %278 = arith.mulf %277, %271 : vector<2x256xf32>
    %279 = arith.addf %269, %278 : vector<2x256xf32>
    %c2_100 = arith.constant 2 : index
    %c0_101 = arith.constant 0 : index
    %c113_102 = arith.constant 113 : index
    %280 = vector.load %arg9[%c2_100, %c0_101, %c113_102] : memref<4x2x512xf32, #tpu.memory_space<vmem>>, vector<1x2x256xf32>
    %281 = vector.shape_cast %280 : vector<1x2x256xf32> to vector<2x256xf32>
    %c20 = arith.constant 20 : index
    %282 = memref.load %arg2[%c20] : memref<72xf32, #tpu.memory_space<smem>>
    %283 = vector.broadcast %282 : f32 to vector<2x256xf32>
    %284 = arith.mulf %283, %281 : vector<2x256xf32>
    %285 = arith.addf %275, %284 : vector<2x256xf32>
    %c56 = arith.constant 56 : index
    %286 = memref.load %arg2[%c56] : memref<72xf32, #tpu.memory_space<smem>>
    %287 = vector.broadcast %286 : f32 to vector<2x256xf32>
    %288 = arith.mulf %287, %281 : vector<2x256xf32>
    %289 = arith.addf %279, %288 : vector<2x256xf32>
    %c3_103 = arith.constant 3 : index
    %c0_104 = arith.constant 0 : index
    %c113_105 = arith.constant 113 : index
    %290 = vector.load %arg9[%c3_103, %c0_104, %c113_105] : memref<4x2x512xf32, #tpu.memory_space<vmem>>, vector<1x2x256xf32>
    %291 = vector.shape_cast %290 : vector<1x2x256xf32> to vector<2x256xf32>
    %c29 = arith.constant 29 : index
    %292 = memref.load %arg2[%c29] : memref<72xf32, #tpu.memory_space<smem>>
    %293 = vector.broadcast %292 : f32 to vector<2x256xf32>
    %294 = arith.mulf %293, %291 : vector<2x256xf32>
    %295 = arith.addf %285, %294 : vector<2x256xf32>
    %c65 = arith.constant 65 : index
    %296 = memref.load %arg2[%c65] : memref<72xf32, #tpu.memory_space<smem>>
    %297 = vector.broadcast %296 : f32 to vector<2x256xf32>
    %298 = arith.mulf %297, %291 : vector<2x256xf32>
    %299 = arith.addf %289, %298 : vector<2x256xf32>
    %c0_106 = arith.constant 0 : index
    %c0_107 = arith.constant 0 : index
    %c129 = arith.constant 129 : index
    %300 = vector.load %arg9[%c0_106, %c0_107, %c129] : memref<4x2x512xf32, #tpu.memory_space<vmem>>, vector<1x2x256xf32>
    %301 = vector.shape_cast %300 : vector<1x2x256xf32> to vector<2x256xf32>
    %c5 = arith.constant 5 : index
    %302 = memref.load %arg2[%c5] : memref<72xf32, #tpu.memory_space<smem>>
    %303 = vector.broadcast %302 : f32 to vector<2x256xf32>
    %304 = arith.mulf %303, %301 : vector<2x256xf32>
    %305 = arith.addf %295, %304 : vector<2x256xf32>
    %c41 = arith.constant 41 : index
    %306 = memref.load %arg2[%c41] : memref<72xf32, #tpu.memory_space<smem>>
    %307 = vector.broadcast %306 : f32 to vector<2x256xf32>
    %308 = arith.mulf %307, %301 : vector<2x256xf32>
    %309 = arith.addf %299, %308 : vector<2x256xf32>
    %c1_108 = arith.constant 1 : index
    %c0_109 = arith.constant 0 : index
    %c129_110 = arith.constant 129 : index
    %310 = vector.load %arg9[%c1_108, %c0_109, %c129_110] : memref<4x2x512xf32, #tpu.memory_space<vmem>>, vector<1x2x256xf32>
    %311 = vector.shape_cast %310 : vector<1x2x256xf32> to vector<2x256xf32>
    %c14 = arith.constant 14 : index
    %312 = memref.load %arg2[%c14] : memref<72xf32, #tpu.memory_space<smem>>
    %313 = vector.broadcast %312 : f32 to vector<2x256xf32>
    %314 = arith.mulf %313, %311 : vector<2x256xf32>
    %315 = arith.addf %305, %314 : vector<2x256xf32>
    %c50 = arith.constant 50 : index
    %316 = memref.load %arg2[%c50] : memref<72xf32, #tpu.memory_space<smem>>
    %317 = vector.broadcast %316 : f32 to vector<2x256xf32>
    %318 = arith.mulf %317, %311 : vector<2x256xf32>
    %319 = arith.addf %309, %318 : vector<2x256xf32>
    %c2_111 = arith.constant 2 : index
    %c0_112 = arith.constant 0 : index
    %c129_113 = arith.constant 129 : index
    %320 = vector.load %arg9[%c2_111, %c0_112, %c129_113] : memref<4x2x512xf32, #tpu.memory_space<vmem>>, vector<1x2x256xf32>
    %321 = vector.shape_cast %320 : vector<1x2x256xf32> to vector<2x256xf32>
    %c23 = arith.constant 23 : index
    %322 = memref.load %arg2[%c23] : memref<72xf32, #tpu.memory_space<smem>>
    %323 = vector.broadcast %322 : f32 to vector<2x256xf32>
    %324 = arith.mulf %323, %321 : vector<2x256xf32>
    %325 = arith.addf %315, %324 : vector<2x256xf32>
    %c59 = arith.constant 59 : index
    %326 = memref.load %arg2[%c59] : memref<72xf32, #tpu.memory_space<smem>>
    %327 = vector.broadcast %326 : f32 to vector<2x256xf32>
    %328 = arith.mulf %327, %321 : vector<2x256xf32>
    %329 = arith.addf %319, %328 : vector<2x256xf32>
    %c3_114 = arith.constant 3 : index
    %c0_115 = arith.constant 0 : index
    %c129_116 = arith.constant 129 : index
    %330 = vector.load %arg9[%c3_114, %c0_115, %c129_116] : memref<4x2x512xf32, #tpu.memory_space<vmem>>, vector<1x2x256xf32>
    %331 = vector.shape_cast %330 : vector<1x2x256xf32> to vector<2x256xf32>
    %c32 = arith.constant 32 : index
    %332 = memref.load %arg2[%c32] : memref<72xf32, #tpu.memory_space<smem>>
    %333 = vector.broadcast %332 : f32 to vector<2x256xf32>
    %334 = arith.mulf %333, %331 : vector<2x256xf32>
    %335 = arith.addf %325, %334 : vector<2x256xf32>
    %c68 = arith.constant 68 : index
    %336 = memref.load %arg2[%c68] : memref<72xf32, #tpu.memory_space<smem>>
    %337 = vector.broadcast %336 : f32 to vector<2x256xf32>
    %338 = arith.mulf %337, %331 : vector<2x256xf32>
    %339 = arith.addf %329, %338 : vector<2x256xf32>
    %c0_117 = arith.constant 0 : index
    %c0_118 = arith.constant 0 : index
    %c145 = arith.constant 145 : index
    %340 = vector.load %arg9[%c0_117, %c0_118, %c145] : memref<4x2x512xf32, #tpu.memory_space<vmem>>, vector<1x2x256xf32>
    %341 = vector.shape_cast %340 : vector<1x2x256xf32> to vector<2x256xf32>
    %c8 = arith.constant 8 : index
    %342 = memref.load %arg2[%c8] : memref<72xf32, #tpu.memory_space<smem>>
    %343 = vector.broadcast %342 : f32 to vector<2x256xf32>
    %344 = arith.mulf %343, %341 : vector<2x256xf32>
    %345 = arith.addf %335, %344 : vector<2x256xf32>
    %c44 = arith.constant 44 : index
    %346 = memref.load %arg2[%c44] : memref<72xf32, #tpu.memory_space<smem>>
    %347 = vector.broadcast %346 : f32 to vector<2x256xf32>
    %348 = arith.mulf %347, %341 : vector<2x256xf32>
    %349 = arith.addf %339, %348 : vector<2x256xf32>
    %c1_119 = arith.constant 1 : index
    %c0_120 = arith.constant 0 : index
    %c145_121 = arith.constant 145 : index
    %350 = vector.load %arg9[%c1_119, %c0_120, %c145_121] : memref<4x2x512xf32, #tpu.memory_space<vmem>>, vector<1x2x256xf32>
    %351 = vector.shape_cast %350 : vector<1x2x256xf32> to vector<2x256xf32>
    %c17 = arith.constant 17 : index
    %352 = memref.load %arg2[%c17] : memref<72xf32, #tpu.memory_space<smem>>
    %353 = vector.broadcast %352 : f32 to vector<2x256xf32>
    %354 = arith.mulf %353, %351 : vector<2x256xf32>
    %355 = arith.addf %345, %354 : vector<2x256xf32>
    %c53 = arith.constant 53 : index
    %356 = memref.load %arg2[%c53] : memref<72xf32, #tpu.memory_space<smem>>
    %357 = vector.broadcast %356 : f32 to vector<2x256xf32>
    %358 = arith.mulf %357, %351 : vector<2x256xf32>
    %359 = arith.addf %349, %358 : vector<2x256xf32>
    %c2_122 = arith.constant 2 : index
    %c0_123 = arith.constant 0 : index
    %c145_124 = arith.constant 145 : index
    %360 = vector.load %arg9[%c2_122, %c0_123, %c145_124] : memref<4x2x512xf32, #tpu.memory_space<vmem>>, vector<1x2x256xf32>
    %361 = vector.shape_cast %360 : vector<1x2x256xf32> to vector<2x256xf32>
    %c26 = arith.constant 26 : index
    %362 = memref.load %arg2[%c26] : memref<72xf32, #tpu.memory_space<smem>>
    %363 = vector.broadcast %362 : f32 to vector<2x256xf32>
    %364 = arith.mulf %363, %361 : vector<2x256xf32>
    %365 = arith.addf %355, %364 : vector<2x256xf32>
    %c62 = arith.constant 62 : index
    %366 = memref.load %arg2[%c62] : memref<72xf32, #tpu.memory_space<smem>>
    %367 = vector.broadcast %366 : f32 to vector<2x256xf32>
    %368 = arith.mulf %367, %361 : vector<2x256xf32>
    %369 = arith.addf %359, %368 : vector<2x256xf32>
    %c3_125 = arith.constant 3 : index
    %c0_126 = arith.constant 0 : index
    %c145_127 = arith.constant 145 : index
    %370 = vector.load %arg9[%c3_125, %c0_126, %c145_127] : memref<4x2x512xf32, #tpu.memory_space<vmem>>, vector<1x2x256xf32>
    %371 = vector.shape_cast %370 : vector<1x2x256xf32> to vector<2x256xf32>
    %c35 = arith.constant 35 : index
    %372 = memref.load %arg2[%c35] : memref<72xf32, #tpu.memory_space<smem>>
    %373 = vector.broadcast %372 : f32 to vector<2x256xf32>
    %374 = arith.mulf %373, %371 : vector<2x256xf32>
    %375 = arith.addf %365, %374 : vector<2x256xf32>
    %c71 = arith.constant 71 : index
    %376 = memref.load %arg2[%c71] : memref<72xf32, #tpu.memory_space<smem>>
    %377 = vector.broadcast %376 : f32 to vector<2x256xf32>
    %378 = arith.mulf %377, %371 : vector<2x256xf32>
    %379 = arith.addf %369, %378 : vector<2x256xf32>
    %c1_i32 = arith.constant 1 : i32
    %380 = vector.broadcast %c1_i32 : i32 to vector<1x256xi32>
    %381 = arith.cmpi sge, %2, %380 : vector<1x256xi32>
    %c16_i32 = arith.constant 16 : i32
    %382 = vector.broadcast %c16_i32 : i32 to vector<1x256xi32>
    %383 = arith.cmpi slt, %2, %382 : vector<1x256xi32>
    %384 = arith.andi %381, %383 : vector<1x256xi1>
    %cst_128 = arith.constant 0.000000e+00 : f32
    %385 = vector.shape_cast %384 : vector<1x256xi1> to vector<1x256xi1>
    %386 = vector.broadcast %385 : vector<1x256xi1> to vector<2x256xi1>
    %387 = vector.broadcast %cst_128 : f32 to vector<2x256xf32>
    %388 = arith.select %386, %139, %387 : vector<2x256xi1>, vector<2x256xf32>
    %c0_i32 = arith.constant 0 : i32
    %389 = vector.broadcast %c0_i32 : i32 to vector<1x256xi32>
    %390 = arith.cmpi sge, %2, %389 : vector<1x256xi32>
    %c15_i32_129 = arith.constant 15 : i32
    %391 = vector.broadcast %c15_i32_129 : i32 to vector<1x256xi32>
    %392 = arith.cmpi slt, %2, %391 : vector<1x256xi32>
    %393 = arith.andi %390, %392 : vector<1x256xi1>
    %cst_130 = arith.constant 0.000000e+00 : f32
    %394 = vector.shape_cast %393 : vector<1x256xi1> to vector<1x256xi1>
    %395 = vector.broadcast %394 : vector<1x256xi1> to vector<2x256xi1>
    %396 = vector.broadcast %cst_130 : f32 to vector<2x256xf32>
    %397 = arith.select %395, %375, %396 : vector<2x256xi1>, vector<2x256xf32>
    %c0_131 = arith.constant 0 : index
    %398 = memref.load %arg3[%c0_131] : memref<2xf32, #tpu.memory_space<smem>>
    %399 = arith.addf %388, %257 : vector<2x256xf32>
    %400 = arith.addf %399, %397 : vector<2x256xf32>
    %401 = vector.broadcast %398 : f32 to vector<2x256xf32>
    %402 = arith.addf %401, %400 : vector<2x256xf32>
    %cst_132 = arith.constant 0.000000e+00 : f32
    %403 = vector.shape_cast %384 : vector<1x256xi1> to vector<1x256xi1>
    %404 = vector.broadcast %403 : vector<1x256xi1> to vector<2x256xi1>
    %405 = vector.broadcast %cst_132 : f32 to vector<2x256xf32>
    %406 = arith.select %404, %143, %405 : vector<2x256xi1>, vector<2x256xf32>
    %cst_133 = arith.constant 0.000000e+00 : f32
    %407 = vector.shape_cast %393 : vector<1x256xi1> to vector<1x256xi1>
    %408 = vector.broadcast %407 : vector<1x256xi1> to vector<2x256xi1>
    %409 = vector.broadcast %cst_133 : f32 to vector<2x256xf32>
    %410 = arith.select %408, %379, %409 : vector<2x256xi1>, vector<2x256xf32>
    %c1_134 = arith.constant 1 : index
    %411 = memref.load %arg3[%c1_134] : memref<2xf32, #tpu.memory_space<smem>>
    %412 = arith.addf %406, %261 : vector<2x256xf32>
    %413 = arith.addf %412, %410 : vector<2x256xf32>
    %414 = vector.broadcast %411 : f32 to vector<2x256xf32>
    %415 = arith.addf %414, %413 : vector<2x256xf32>
    %c0_135 = arith.constant 0 : index
    %c0_136 = arith.constant 0 : index
    %c128_137 = arith.constant 128 : index
    %416 = vector.load %arg9[%c0_135, %c0_136, %c128_137] : memref<4x2x512xf32, #tpu.memory_space<vmem>>, vector<1x2x256xf32>
    %417 = vector.shape_cast %416 : vector<1x2x256xf32> to vector<2x256xf32>
    %418 = vector.shape_cast %402 : vector<2x256xf32> to vector<1x2x256xf32>
    tpu.vector_store %arg9[%c0_135, %c0_136, %c128_137], %418 {strides = array<i32>} : memref<4x2x512xf32, #tpu.memory_space<vmem>>, vector<1x2x256xf32>,
    %c1_138 = arith.constant 1 : index
    %c0_139 = arith.constant 0 : index
    %c128_140 = arith.constant 128 : index
    %419 = vector.load %arg9[%c1_138, %c0_139, %c128_140] : memref<4x2x512xf32, #tpu.memory_space<vmem>>, vector<1x2x256xf32>
    %420 = vector.shape_cast %419 : vector<1x2x256xf32> to vector<2x256xf32>
    %421 = vector.shape_cast %415 : vector<2x256xf32> to vector<1x2x256xf32>
    tpu.vector_store %arg9[%c1_138, %c0_139, %c128_140], %421 {strides = array<i32>} : memref<4x2x512xf32, #tpu.memory_space<vmem>>, vector<1x2x256xf32>,
    %c0_141 = arith.constant 0 : index
    %c0_142 = arith.constant 0 : index
    %c111_143 = arith.constant 111 : index
    %422 = vector.load %arg9[%c0_141, %c0_142, %c111_143] : memref<4x2x512xf32, #tpu.memory_space<vmem>>, vector<1x2x256xf32>
    %423 = vector.shape_cast %422 : vector<1x2x256xf32> to vector<2x256xf32>
    %c0_144 = arith.constant 0 : index
    %424 = memref.load %arg4[%c0_144] : memref<36xf32, #tpu.memory_space<smem>>
    %425 = vector.broadcast %424 : f32 to vector<2x256xf32>
    %426 = arith.mulf %425, %423 : vector<2x256xf32>
    %c18_145 = arith.constant 18 : index
    %427 = memref.load %arg4[%c18_145] : memref<36xf32, #tpu.memory_space<smem>>
    %428 = vector.broadcast %427 : f32 to vector<2x256xf32>
    %429 = arith.mulf %428, %423 : vector<2x256xf32>
    %c1_146 = arith.constant 1 : index
    %c0_147 = arith.constant 0 : index
    %c111_148 = arith.constant 111 : index
    %430 = vector.load %arg9[%c1_146, %c0_147, %c111_148] : memref<4x2x512xf32, #tpu.memory_space<vmem>>, vector<1x2x256xf32>
    %431 = vector.shape_cast %430 : vector<1x2x256xf32> to vector<2x256xf32>
    %c9_149 = arith.constant 9 : index
    %432 = memref.load %arg4[%c9_149] : memref<36xf32, #tpu.memory_space<smem>>
    %433 = vector.broadcast %432 : f32 to vector<2x256xf32>
    %434 = arith.mulf %433, %431 : vector<2x256xf32>
    %435 = arith.addf %426, %434 : vector<2x256xf32>
    %c27_150 = arith.constant 27 : index
    %436 = memref.load %arg4[%c27_150] : memref<36xf32, #tpu.memory_space<smem>>
    %437 = vector.broadcast %436 : f32 to vector<2x256xf32>
    %438 = arith.mulf %437, %431 : vector<2x256xf32>
    %439 = arith.addf %429, %438 : vector<2x256xf32>
    %c0_151 = arith.constant 0 : index
    %c0_152 = arith.constant 0 : index
    %c127_153 = arith.constant 127 : index
    %440 = vector.load %arg9[%c0_151, %c0_152, %c127_153] : memref<4x2x512xf32, #tpu.memory_space<vmem>>, vector<1x2x256xf32>
    %441 = vector.shape_cast %440 : vector<1x2x256xf32> to vector<2x256xf32>
    %c3_154 = arith.constant 3 : index
    %442 = memref.load %arg4[%c3_154] : memref<36xf32, #tpu.memory_space<smem>>
    %443 = vector.broadcast %442 : f32 to vector<2x256xf32>
    %444 = arith.mulf %443, %441 : vector<2x256xf32>
    %445 = arith.addf %435, %444 : vector<2x256xf32>
    %c21_155 = arith.constant 21 : index
    %446 = memref.load %arg4[%c21_155] : memref<36xf32, #tpu.memory_space<smem>>
    %447 = vector.broadcast %446 : f32 to vector<2x256xf32>
    %448 = arith.mulf %447, %441 : vector<2x256xf32>
    %449 = arith.addf %439, %448 : vector<2x256xf32>
    %c1_156 = arith.constant 1 : index
    %c0_157 = arith.constant 0 : index
    %c127_158 = arith.constant 127 : index
    %450 = vector.load %arg9[%c1_156, %c0_157, %c127_158] : memref<4x2x512xf32, #tpu.memory_space<vmem>>, vector<1x2x256xf32>
    %451 = vector.shape_cast %450 : vector<1x2x256xf32> to vector<2x256xf32>
    %c12_159 = arith.constant 12 : index
    %452 = memref.load %arg4[%c12_159] : memref<36xf32, #tpu.memory_space<smem>>
    %453 = vector.broadcast %452 : f32 to vector<2x256xf32>
    %454 = arith.mulf %453, %451 : vector<2x256xf32>
    %455 = arith.addf %445, %454 : vector<2x256xf32>
    %c30_160 = arith.constant 30 : index
    %456 = memref.load %arg4[%c30_160] : memref<36xf32, #tpu.memory_space<smem>>
    %457 = vector.broadcast %456 : f32 to vector<2x256xf32>
    %458 = arith.mulf %457, %451 : vector<2x256xf32>
    %459 = arith.addf %449, %458 : vector<2x256xf32>
    %c0_161 = arith.constant 0 : index
    %c0_162 = arith.constant 0 : index
    %c143_163 = arith.constant 143 : index
    %460 = vector.load %arg9[%c0_161, %c0_162, %c143_163] : memref<4x2x512xf32, #tpu.memory_space<vmem>>, vector<1x2x256xf32>
    %461 = vector.shape_cast %460 : vector<1x2x256xf32> to vector<2x256xf32>
    %c6_164 = arith.constant 6 : index
    %462 = memref.load %arg4[%c6_164] : memref<36xf32, #tpu.memory_space<smem>>
    %463 = vector.broadcast %462 : f32 to vector<2x256xf32>
    %464 = arith.mulf %463, %461 : vector<2x256xf32>
    %465 = arith.addf %455, %464 : vector<2x256xf32>
    %c24_165 = arith.constant 24 : index
    %466 = memref.load %arg4[%c24_165] : memref<36xf32, #tpu.memory_space<smem>>
    %467 = vector.broadcast %466 : f32 to vector<2x256xf32>
    %468 = arith.mulf %467, %461 : vector<2x256xf32>
    %469 = arith.addf %459, %468 : vector<2x256xf32>
    %c1_166 = arith.constant 1 : index
    %c0_167 = arith.constant 0 : index
    %c143_168 = arith.constant 143 : index
    %470 = vector.load %arg9[%c1_166, %c0_167, %c143_168] : memref<4x2x512xf32, #tpu.memory_space<vmem>>, vector<1x2x256xf32>
    %471 = vector.shape_cast %470 : vector<1x2x256xf32> to vector<2x256xf32>
    %c15_169 = arith.constant 15 : index
    %472 = memref.load %arg4[%c15_169] : memref<36xf32, #tpu.memory_space<smem>>
    %473 = vector.broadcast %472 : f32 to vector<2x256xf32>
    %474 = arith.mulf %473, %471 : vector<2x256xf32>
    %475 = arith.addf %465, %474 : vector<2x256xf32>
    %c33_170 = arith.constant 33 : index
    %476 = memref.load %arg4[%c33_170] : memref<36xf32, #tpu.memory_space<smem>>
    %477 = vector.broadcast %476 : f32 to vector<2x256xf32>
    %478 = arith.mulf %477, %471 : vector<2x256xf32>
    %479 = arith.addf %469, %478 : vector<2x256xf32>
    %c0_171 = arith.constant 0 : index
    %c0_172 = arith.constant 0 : index
    %c112_173 = arith.constant 112 : index
    %480 = vector.load %arg9[%c0_171, %c0_172, %c112_173] : memref<4x2x512xf32, #tpu.memory_space<vmem>>, vector<1x2x256xf32>
    %481 = vector.shape_cast %480 : vector<1x2x256xf32> to vector<2x256xf32>
    %c1_174 = arith.constant 1 : index
    %482 = memref.load %arg4[%c1_174] : memref<36xf32, #tpu.memory_space<smem>>
    %483 = vector.broadcast %482 : f32 to vector<2x256xf32>
    %484 = arith.mulf %483, %481 : vector<2x256xf32>
    %c19_175 = arith.constant 19 : index
    %485 = memref.load %arg4[%c19_175] : memref<36xf32, #tpu.memory_space<smem>>
    %486 = vector.broadcast %485 : f32 to vector<2x256xf32>
    %487 = arith.mulf %486, %481 : vector<2x256xf32>
    %c1_176 = arith.constant 1 : index
    %c0_177 = arith.constant 0 : index
    %c112_178 = arith.constant 112 : index
    %488 = vector.load %arg9[%c1_176, %c0_177, %c112_178] : memref<4x2x512xf32, #tpu.memory_space<vmem>>, vector<1x2x256xf32>
    %489 = vector.shape_cast %488 : vector<1x2x256xf32> to vector<2x256xf32>
    %c10_179 = arith.constant 10 : index
    %490 = memref.load %arg4[%c10_179] : memref<36xf32, #tpu.memory_space<smem>>
    %491 = vector.broadcast %490 : f32 to vector<2x256xf32>
    %492 = arith.mulf %491, %489 : vector<2x256xf32>
    %493 = arith.addf %484, %492 : vector<2x256xf32>
    %c28_180 = arith.constant 28 : index
    %494 = memref.load %arg4[%c28_180] : memref<36xf32, #tpu.memory_space<smem>>
    %495 = vector.broadcast %494 : f32 to vector<2x256xf32>
    %496 = arith.mulf %495, %489 : vector<2x256xf32>
    %497 = arith.addf %487, %496 : vector<2x256xf32>
    %c0_181 = arith.constant 0 : index
    %c0_182 = arith.constant 0 : index
    %c128_183 = arith.constant 128 : index
    %498 = vector.load %arg9[%c0_181, %c0_182, %c128_183] : memref<4x2x512xf32, #tpu.memory_space<vmem>>, vector<1x2x256xf32>
    %499 = vector.shape_cast %498 : vector<1x2x256xf32> to vector<2x256xf32>
    %c4_184 = arith.constant 4 : index
    %500 = memref.load %arg4[%c4_184] : memref<36xf32, #tpu.memory_space<smem>>
    %501 = vector.broadcast %500 : f32 to vector<2x256xf32>
    %502 = arith.mulf %501, %499 : vector<2x256xf32>
    %503 = arith.addf %493, %502 : vector<2x256xf32>
    %c22_185 = arith.constant 22 : index
    %504 = memref.load %arg4[%c22_185] : memref<36xf32, #tpu.memory_space<smem>>
    %505 = vector.broadcast %504 : f32 to vector<2x256xf32>
    %506 = arith.mulf %505, %499 : vector<2x256xf32>
    %507 = arith.addf %497, %506 : vector<2x256xf32>
    %c1_186 = arith.constant 1 : index
    %c0_187 = arith.constant 0 : index
    %c128_188 = arith.constant 128 : index
    %508 = vector.load %arg9[%c1_186, %c0_187, %c128_188] : memref<4x2x512xf32, #tpu.memory_space<vmem>>, vector<1x2x256xf32>
    %509 = vector.shape_cast %508 : vector<1x2x256xf32> to vector<2x256xf32>
    %c13_189 = arith.constant 13 : index
    %510 = memref.load %arg4[%c13_189] : memref<36xf32, #tpu.memory_space<smem>>
    %511 = vector.broadcast %510 : f32 to vector<2x256xf32>
    %512 = arith.mulf %511, %509 : vector<2x256xf32>
    %513 = arith.addf %503, %512 : vector<2x256xf32>
    %c31_190 = arith.constant 31 : index
    %514 = memref.load %arg4[%c31_190] : memref<36xf32, #tpu.memory_space<smem>>
    %515 = vector.broadcast %514 : f32 to vector<2x256xf32>
    %516 = arith.mulf %515, %509 : vector<2x256xf32>
    %517 = arith.addf %507, %516 : vector<2x256xf32>
    %c0_191 = arith.constant 0 : index
    %c0_192 = arith.constant 0 : index
    %c144_193 = arith.constant 144 : index
    %518 = vector.load %arg9[%c0_191, %c0_192, %c144_193] : memref<4x2x512xf32, #tpu.memory_space<vmem>>, vector<1x2x256xf32>
    %519 = vector.shape_cast %518 : vector<1x2x256xf32> to vector<2x256xf32>
    %c7_194 = arith.constant 7 : index
    %520 = memref.load %arg4[%c7_194] : memref<36xf32, #tpu.memory_space<smem>>
    %521 = vector.broadcast %520 : f32 to vector<2x256xf32>
    %522 = arith.mulf %521, %519 : vector<2x256xf32>
    %523 = arith.addf %513, %522 : vector<2x256xf32>
    %c25_195 = arith.constant 25 : index
    %524 = memref.load %arg4[%c25_195] : memref<36xf32, #tpu.memory_space<smem>>
    %525 = vector.broadcast %524 : f32 to vector<2x256xf32>
    %526 = arith.mulf %525, %519 : vector<2x256xf32>
    %527 = arith.addf %517, %526 : vector<2x256xf32>
    %c1_196 = arith.constant 1 : index
    %c0_197 = arith.constant 0 : index
    %c144_198 = arith.constant 144 : index
    %528 = vector.load %arg9[%c1_196, %c0_197, %c144_198] : memref<4x2x512xf32, #tpu.memory_space<vmem>>, vector<1x2x256xf32>
    %529 = vector.shape_cast %528 : vector<1x2x256xf32> to vector<2x256xf32>
    %c16_199 = arith.constant 16 : index
    %530 = memref.load %arg4[%c16_199] : memref<36xf32, #tpu.memory_space<smem>>
    %531 = vector.broadcast %530 : f32 to vector<2x256xf32>
    %532 = arith.mulf %531, %529 : vector<2x256xf32>
    %533 = arith.addf %523, %532 : vector<2x256xf32>
    %c34_200 = arith.constant 34 : index
    %534 = memref.load %arg4[%c34_200] : memref<36xf32, #tpu.memory_space<smem>>
    %535 = vector.broadcast %534 : f32 to vector<2x256xf32>
    %536 = arith.mulf %535, %529 : vector<2x256xf32>
    %537 = arith.addf %527, %536 : vector<2x256xf32>
    %c0_201 = arith.constant 0 : index
    %c0_202 = arith.constant 0 : index
    %c113_203 = arith.constant 113 : index
    %538 = vector.load %arg9[%c0_201, %c0_202, %c113_203] : memref<4x2x512xf32, #tpu.memory_space<vmem>>, vector<1x2x256xf32>
    %539 = vector.shape_cast %538 : vector<1x2x256xf32> to vector<2x256xf32>
    %c2_204 = arith.constant 2 : index
    %540 = memref.load %arg4[%c2_204] : memref<36xf32, #tpu.memory_space<smem>>
    %541 = vector.broadcast %540 : f32 to vector<2x256xf32>
    %542 = arith.mulf %541, %539 : vector<2x256xf32>
    %c20_205 = arith.constant 20 : index
    %543 = memref.load %arg4[%c20_205] : memref<36xf32, #tpu.memory_space<smem>>
    %544 = vector.broadcast %543 : f32 to vector<2x256xf32>
    %545 = arith.mulf %544, %539 : vector<2x256xf32>
    %c1_206 = arith.constant 1 : index
    %c0_207 = arith.constant 0 : index
    %c113_208 = arith.constant 113 : index
    %546 = vector.load %arg9[%c1_206, %c0_207, %c113_208] : memref<4x2x512xf32, #tpu.memory_space<vmem>>, vector<1x2x256xf32>
    %547 = vector.shape_cast %546 : vector<1x2x256xf32> to vector<2x256xf32>
    %c11_209 = arith.constant 11 : index
    %548 = memref.load %arg4[%c11_209] : memref<36xf32, #tpu.memory_space<smem>>
    %549 = vector.broadcast %548 : f32 to vector<2x256xf32>
    %550 = arith.mulf %549, %547 : vector<2x256xf32>
    %551 = arith.addf %542, %550 : vector<2x256xf32>
    %c29_210 = arith.constant 29 : index
    %552 = memref.load %arg4[%c29_210] : memref<36xf32, #tpu.memory_space<smem>>
    %553 = vector.broadcast %552 : f32 to vector<2x256xf32>
    %554 = arith.mulf %553, %547 : vector<2x256xf32>
    %555 = arith.addf %545, %554 : vector<2x256xf32>
    %c0_211 = arith.constant 0 : index
    %c0_212 = arith.constant 0 : index
    %c129_213 = arith.constant 129 : index
    %556 = vector.load %arg9[%c0_211, %c0_212, %c129_213] : memref<4x2x512xf32, #tpu.memory_space<vmem>>, vector<1x2x256xf32>
    %557 = vector.shape_cast %556 : vector<1x2x256xf32> to vector<2x256xf32>
    %c5_214 = arith.constant 5 : index
    %558 = memref.load %arg4[%c5_214] : memref<36xf32, #tpu.memory_space<smem>>
    %559 = vector.broadcast %558 : f32 to vector<2x256xf32>
    %560 = arith.mulf %559, %557 : vector<2x256xf32>
    %561 = arith.addf %551, %560 : vector<2x256xf32>
    %c23_215 = arith.constant 23 : index
    %562 = memref.load %arg4[%c23_215] : memref<36xf32, #tpu.memory_space<smem>>
    %563 = vector.broadcast %562 : f32 to vector<2x256xf32>
    %564 = arith.mulf %563, %557 : vector<2x256xf32>
    %565 = arith.addf %555, %564 : vector<2x256xf32>
    %c1_216 = arith.constant 1 : index
    %c0_217 = arith.constant 0 : index
    %c129_218 = arith.constant 129 : index
    %566 = vector.load %arg9[%c1_216, %c0_217, %c129_218] : memref<4x2x512xf32, #tpu.memory_space<vmem>>, vector<1x2x256xf32>
    %567 = vector.shape_cast %566 : vector<1x2x256xf32> to vector<2x256xf32>
    %c14_219 = arith.constant 14 : index
    %568 = memref.load %arg4[%c14_219] : memref<36xf32, #tpu.memory_space<smem>>
    %569 = vector.broadcast %568 : f32 to vector<2x256xf32>
    %570 = arith.mulf %569, %567 : vector<2x256xf32>
    %571 = arith.addf %561, %570 : vector<2x256xf32>
    %c32_220 = arith.constant 32 : index
    %572 = memref.load %arg4[%c32_220] : memref<36xf32, #tpu.memory_space<smem>>
    %573 = vector.broadcast %572 : f32 to vector<2x256xf32>
    %574 = arith.mulf %573, %567 : vector<2x256xf32>
    %575 = arith.addf %565, %574 : vector<2x256xf32>
    %c0_221 = arith.constant 0 : index
    %c0_222 = arith.constant 0 : index
    %c145_223 = arith.constant 145 : index
    %576 = vector.load %arg9[%c0_221, %c0_222, %c145_223] : memref<4x2x512xf32, #tpu.memory_space<vmem>>, vector<1x2x256xf32>
    %577 = vector.shape_cast %576 : vector<1x2x256xf32> to vector<2x256xf32>
    %c8_224 = arith.constant 8 : index
    %578 = memref.load %arg4[%c8_224] : memref<36xf32, #tpu.memory_space<smem>>
    %579 = vector.broadcast %578 : f32 to vector<2x256xf32>
    %580 = arith.mulf %579, %577 : vector<2x256xf32>
    %581 = arith.addf %571, %580 : vector<2x256xf32>
    %c26_225 = arith.constant 26 : index
    %582 = memref.load %arg4[%c26_225] : memref<36xf32, #tpu.memory_space<smem>>
    %583 = vector.broadcast %582 : f32 to vector<2x256xf32>
    %584 = arith.mulf %583, %577 : vector<2x256xf32>
    %585 = arith.addf %575, %584 : vector<2x256xf32>
    %c1_226 = arith.constant 1 : index
    %c0_227 = arith.constant 0 : index
    %c145_228 = arith.constant 145 : index
    %586 = vector.load %arg9[%c1_226, %c0_227, %c145_228] : memref<4x2x512xf32, #tpu.memory_space<vmem>>, vector<1x2x256xf32>
    %587 = vector.shape_cast %586 : vector<1x2x256xf32> to vector<2x256xf32>
    %c17_229 = arith.constant 17 : index
    %588 = memref.load %arg4[%c17_229] : memref<36xf32, #tpu.memory_space<smem>>
    %589 = vector.broadcast %588 : f32 to vector<2x256xf32>
    %590 = arith.mulf %589, %587 : vector<2x256xf32>
    %591 = arith.addf %581, %590 : vector<2x256xf32>
    %c35_230 = arith.constant 35 : index
    %592 = memref.load %arg4[%c35_230] : memref<36xf32, #tpu.memory_space<smem>>
    %593 = vector.broadcast %592 : f32 to vector<2x256xf32>
    %594 = arith.mulf %593, %587 : vector<2x256xf32>
    %595 = arith.addf %585, %594 : vector<2x256xf32>
    %cst_231 = arith.constant 0.000000e+00 : f32
    %596 = vector.shape_cast %384 : vector<1x256xi1> to vector<1x256xi1>
    %597 = vector.broadcast %596 : vector<1x256xi1> to vector<2x256xi1>
    %598 = vector.broadcast %cst_231 : f32 to vector<2x256xf32>
    %599 = arith.select %597, %475, %598 : vector<2x256xi1>, vector<2x256xf32>
    %cst_232 = arith.constant 0.000000e+00 : f32
    %600 = vector.shape_cast %393 : vector<1x256xi1> to vector<1x256xi1>
    %601 = vector.broadcast %600 : vector<1x256xi1> to vector<2x256xi1>
    %602 = vector.broadcast %cst_232 : f32 to vector<2x256xf32>
    %603 = arith.select %601, %591, %602 : vector<2x256xi1>, vector<2x256xf32>
    %c0_233 = arith.constant 0 : index
    %604 = memref.load %arg5[%c0_233] : memref<2xf32, #tpu.memory_space<smem>>
    %605 = arith.addf %599, %533 : vector<2x256xf32>
    %606 = arith.addf %605, %603 : vector<2x256xf32>
    %607 = vector.broadcast %604 : f32 to vector<2x256xf32>
    %608 = arith.addf %607, %606 : vector<2x256xf32>
    %cst_234 = arith.constant 0.000000e+00 : f32
    %609 = vector.shape_cast %384 : vector<1x256xi1> to vector<1x256xi1>
    %610 = vector.broadcast %609 : vector<1x256xi1> to vector<2x256xi1>
    %611 = vector.broadcast %cst_234 : f32 to vector<2x256xf32>
    %612 = arith.select %610, %479, %611 : vector<2x256xi1>, vector<2x256xf32>
    %cst_235 = arith.constant 0.000000e+00 : f32
    %613 = vector.shape_cast %393 : vector<1x256xi1> to vector<1x256xi1>
    %614 = vector.broadcast %613 : vector<1x256xi1> to vector<2x256xi1>
    %615 = vector.broadcast %cst_235 : f32 to vector<2x256xf32>
    %616 = arith.select %614, %595, %615 : vector<2x256xi1>, vector<2x256xf32>
    %c1_236 = arith.constant 1 : index
    %617 = memref.load %arg5[%c1_236] : memref<2xf32, #tpu.memory_space<smem>>
    %618 = arith.addf %612, %537 : vector<2x256xf32>
    %619 = arith.addf %618, %616 : vector<2x256xf32>
    %620 = vector.broadcast %617 : f32 to vector<2x256xf32>
    %621 = arith.addf %620, %619 : vector<2x256xf32>
    %c0_237 = arith.constant 0 : index
    %622 = memref.load %arg6[%c0_237] : memref<4xf32, #tpu.memory_space<smem>>
    %623 = vector.broadcast %622 : f32 to vector<2x256xf32>
    %624 = arith.mulf %623, %608 : vector<2x256xf32>
    %c1_238 = arith.constant 1 : index
    %625 = memref.load %arg6[%c1_238] : memref<4xf32, #tpu.memory_space<smem>>
    %626 = vector.broadcast %625 : f32 to vector<2x256xf32>
    %627 = arith.mulf %626, %621 : vector<2x256xf32>
    %c0_239 = arith.constant 0 : index
    %628 = memref.load %arg7[%c0_239] : memref<2xf32, #tpu.memory_space<smem>>
    %629 = arith.addf %624, %627 : vector<2x256xf32>
    %630 = vector.broadcast %628 : f32 to vector<2x256xf32>
    %631 = arith.addf %630, %629 : vector<2x256xf32>
    %c2_240 = arith.constant 2 : index
    %632 = memref.load %arg6[%c2_240] : memref<4xf32, #tpu.memory_space<smem>>
    %633 = vector.broadcast %632 : f32 to vector<2x256xf32>
    %634 = arith.mulf %633, %608 : vector<2x256xf32>
    %c3_241 = arith.constant 3 : index
    %635 = memref.load %arg6[%c3_241] : memref<4xf32, #tpu.memory_space<smem>>
    %636 = vector.broadcast %635 : f32 to vector<2x256xf32>
    %637 = arith.mulf %636, %621 : vector<2x256xf32>
    %c1_242 = arith.constant 1 : index
    %638 = memref.load %arg7[%c1_242] : memref<2xf32, #tpu.memory_space<smem>>
    %639 = arith.addf %634, %637 : vector<2x256xf32>
    %640 = vector.broadcast %638 : f32 to vector<2x256xf32>
    %641 = arith.addf %640, %639 : vector<2x256xf32>
    %cst_243 = arith.constant 1.250000e-01 : f32
    %642 = vector.broadcast %cst_243 : f32 to vector<2x256xf32>
    %643 = arith.mulf %631, %642 : vector<2x256xf32>
    %cst_244 = arith.constant -1.000000e+00 : f32
    %cst_245 = arith.constant 1.000000e+00 : f32
    %644 = vector.broadcast %cst_244 : f32 to vector<2x256xf32>
    %645 = arith.maximumf %644, %643 : vector<2x256xf32>
    %646 = vector.broadcast %cst_245 : f32 to vector<2x256xf32>
    %647 = arith.minimumf %646, %645 : vector<2x256xf32>
    %c0_246 = arith.constant 0 : index
    %c0_247 = arith.constant 0 : index
    %c0_248 = arith.constant 0 : index
    %648 = vector.load %arg8[%c0_246, %c0_247, %c0_248] : memref<2x2x256xf32, #tpu.memory_space<vmem>>, vector<2x1x256xf32>
    %649 = vector.shape_cast %648 : vector<2x1x256xf32> to vector<2x256xf32>
    %650 = vector.shape_cast %647 : vector<2x256xf32> to vector<2x1x256xf32>
    tpu.vector_store %arg8[%c0_246, %c0_247, %c0_248], %650 {strides = array<i32>} : memref<2x2x256xf32, #tpu.memory_space<vmem>>, vector<2x1x256xf32>,
    %cst_249 = arith.constant 1.250000e-01 : f32
    %651 = vector.broadcast %cst_249 : f32 to vector<2x256xf32>
    %652 = arith.mulf %641, %651 : vector<2x256xf32>
    %cst_250 = arith.constant -1.000000e+00 : f32
    %cst_251 = arith.constant 1.000000e+00 : f32
    %653 = vector.broadcast %cst_250 : f32 to vector<2x256xf32>
    %654 = arith.maximumf %653, %652 : vector<2x256xf32>
    %655 = vector.broadcast %cst_251 : f32 to vector<2x256xf32>
    %656 = arith.minimumf %655, %654 : vector<2x256xf32>
    %c0_252 = arith.constant 0 : index
    %c1_253 = arith.constant 1 : index
    %c0_254 = arith.constant 0 : index
    %657 = vector.load %arg8[%c0_252, %c1_253, %c0_254] : memref<2x2x256xf32, #tpu.memory_space<vmem>>, vector<2x1x256xf32>
    %658 = vector.shape_cast %657 : vector<2x1x256xf32> to vector<2x256xf32>
    %659 = vector.shape_cast %656 : vector<2x256xf32> to vector<2x1x256xf32>
    tpu.vector_store %arg8[%c0_252, %c1_253, %c0_254], %659 {strides = array<i32>} : memref<2x2x256xf32, #tpu.memory_space<vmem>>, vector<2x1x256xf32>,
    return
  }
  func.func @transform_0(%arg0: i32) -> (i32, i32, i32) {
    %c0_i32 = arith.constant 0 : i32
    %c0_i32_0 = arith.constant 0 : i32
    %c0_i32_1 = arith.constant 0 : i32
    return %arg0, %c0_i32, %c0_i32_0 : i32, i32, i32
  }
  func.func @transform_1(%arg0: i32) -> i32 {
    %c0_i32 = arith.constant 0 : i32
    %c0_i32_0 = arith.constant 0 : i32
    return %c0_i32 : i32
  }
  func.func @transform_2(%arg0: i32) -> i32 {
    %c0_i32 = arith.constant 0 : i32
    %c0_i32_0 = arith.constant 0 : i32
    return %c0_i32 : i32
  }
  func.func @transform_3(%arg0: i32) -> i32 {
    %c0_i32 = arith.constant 0 : i32
    %c0_i32_0 = arith.constant 0 : i32
    return %c0_i32 : i32
  }
  func.func @transform_4(%arg0: i32) -> i32 {
    %c0_i32 = arith.constant 0 : i32
    %c0_i32_0 = arith.constant 0 : i32
    return %c0_i32 : i32
  }
  func.func @transform_5(%arg0: i32) -> i32 {
    %c0_i32 = arith.constant 0 : i32
    %c0_i32_0 = arith.constant 0 : i32
    return %c0_i32 : i32
  }
  func.func @transform_6(%arg0: i32) -> i32 {
    %c0_i32 = arith.constant 0 : i32
    %c0_i32_0 = arith.constant 0 : i32
    return %c0_i32 : i32
  }
  func.func @transform_7(%arg0: i32) -> (i32, i32, i32) {
    %c0_i32 = arith.constant 0 : i32
    %c0_i32_0 = arith.constant 0 : i32
    %c0_i32_1 = arith.constant 0 : i32
    return %arg0, %c0_i32, %c0_i32_0 : i32, i32, i32
  }
}

</mosaic_0001>

<llo_original>
// kernel: tpu_custom_call.1
$region0: #{tpu_custom_call.1}
  #allocation0 [shape = 'u32[]', space=smem, size = 0x4, offset = 0x4, fixed_abs, tag = 'smem constant byte address 0x4 - core index']
  #allocation1 [shape = 'u32[144,128]{1,0:T(1,128)}', space=vmem, size = 0x12000, scoped, tag = 'internal scratch']
  #allocation2 [shape = 'f32[4,2,512]{2,1,0:T(2,128)}', space=vmem, size = 0x4000, scoped, tag = 'scratch operand']
  %s0 = inlined_call_operand.hbm [shape: f32[2,4,256], index: 0, kind: input, shape index: {}]
  %s1 = inlined_call_operand.vmem [shape: f32[72], index: 1, kind: input, shape index: {}]
  %s2 = inlined_call_operand.vmem [shape: f32[2], index: 2, kind: input, shape index: {}]
  %s3 = inlined_call_operand.vmem [shape: f32[36], index: 3, kind: input, shape index: {}]
  %s4 = inlined_call_operand.vmem [shape: f32[2], index: 4, kind: input, shape index: {}]
  %s5 = inlined_call_operand.vmem [shape: f32[4], index: 5, kind: input, shape index: {}]
  %s6 = inlined_call_operand.vmem [shape: f32[2], index: 6, kind: input, shape index: {}]
  %s7 = inlined_call_operand.hbm [shape: f32[2,2,256], index: 7, kind: output, shape index: {}]
  %s8 = sld [smem:[#allocation0]]
  $region66: #{tpu_custom_call.1} parent=0
    _
  %s10 = ssub.s32 1, %s8
  %s11 = scalar_select 0, %s10, %s8
  $region1: #{tpu_custom_call.1} parent=0
    #allocation3 [shape = 'u8[8192]{0}', space=vmem, size = 0x2000, scoped, tag = 'input window, operand 0, single buffered']
    #allocation4 [shape = 's32[1]{0}', space=sflag, size = 0x4, scoped, tag = 'scoped memory for tpu_custom_call.1']
    #allocation5 [shape = 's32[1]{0}', space=sflag, size = 0x4, scoped, tag = 'scoped memory for tpu_custom_call.1']
    #allocation6 [shape = 's32[1]{0}', space=sflag, size = 0x4, scoped, tag = 'scoped memory for tpu_custom_call.1']
    #allocation7 [shape = 'u8[512]{0}', space=smem, size = 0x200, scoped, tag = 'input window, operand 1, single buffered']
    #allocation8 [shape = 'u8[512]{0}', space=smem, size = 0x200, scoped, tag = 'input window, operand 2, single buffered']
    #allocation9 [shape = 's32[1]{0}', space=sflag, size = 0x4, scoped, tag = 'scoped memory for tpu_custom_call.1']
    #allocation10 [shape = 'u8[512]{0}', space=smem, size = 0x200, scoped, tag = 'input window, operand 3, single buffered']
    #allocation11 [shape = 'u8[512]{0}', space=smem, size = 0x200, scoped, tag = 'input window, operand 4, single buffered']
    #allocation12 [shape = 's32[1]{0}', space=sflag, size = 0x4, scoped, tag = 'scoped memory for tpu_custom_call.1']
    #allocation13 [shape = 'u8[512]{0}', space=smem, size = 0x200, scoped, tag = 'input window, operand 5, single buffered']
    #allocation14 [shape = 'u8[512]{0}', space=smem, size = 0x200, scoped, tag = 'input window, operand 6, single buffered']
    #allocation15 [shape = 's32[1]{0}', space=sflag, size = 0x4, scoped, tag = 'scoped memory for tpu_custom_call.1']
    #allocation16 [shape = 'u8[4096]{0}', space=vmem, size = 0x1000, scoped, tag = 'output window, operand 0, single buffered']
    %12 = vsyncpa [#allocation4], 0
    %13 = vsyncpa [#allocation6], 0
    %14 = vsyncpa [#allocation9], 0
    %15 = vsyncpa [#allocation12], 0
    %16 = vsyncpa [#allocation15], 0
    %17 = vsyncpa [#allocation5], 0
    // Predicated region
    $region2: #{tpu_custom_call.1} parent=1 // pred_check
      _
    $region3: #{tpu_custom_call.1} parent=1 // pred_check_branch
      %19 = sbr.rel (0) target = $region5
    $region4: #{tpu_custom_call.1} parent=1 // pred_region
      %s21 = ssub.s32 256, 256
      %22 = vsyncadd [#allocation4], %s21
      %s23 = sshll.u32 [#allocation3], 4
      %s24 = int_to_ptr.vmem [resolvable:$true] %s23
      %29 = dma.hbm_to_vmem [thread:$0]  %s0, 256, %s24, [#allocation4], 128, 128, 8
    $region5: #{tpu_custom_call.1} parent=1 // pred_fallthru
      _
    // Predicated region
    $region6: #{tpu_custom_call.1} parent=1 // pred_check
      _
    $region7: #{tpu_custom_call.1} parent=1 // pred_check_branch
      %31 = sbr.rel (0) target = $region9
    $region8: #{tpu_custom_call.1} parent=1 // pred_region
      %s33 = ssub.s32 16, 16
      %34 = vsyncadd [#allocation6], %s33
      %s36 = sshll.u32 %s1, 4
      %s37 = int_to_ptr.vmem [resolvable:$true] %s36
      %39 = dma.vmem_to_smem %s37, 16, [#allocation7], [#allocation6]
    $region9: #{tpu_custom_call.1} parent=1 // pred_fallthru
      _
    // Predicated region
    $region10: #{tpu_custom_call.1} parent=1 // pred_check
      _
    $region11: #{tpu_custom_call.1} parent=1 // pred_check_branch
      %41 = sbr.rel (0) target = $region13
    $region12: #{tpu_custom_call.1} parent=1 // pred_region
      %s43 = ssub.s32 16, 16
      %44 = vsyncadd [#allocation9], %s43
      %s46 = sshll.u32 %s2, 4
      %s47 = int_to_ptr.vmem [resolvable:$true] %s46
      %49 = dma.vmem_to_smem %s47, 16, [#allocation8], [#allocation9]
    $region13: #{tpu_custom_call.1} parent=1 // pred_fallthru
      _
    // Predicated region
    $region14: #{tpu_custom_call.1} parent=1 // pred_check
      _
    $region15: #{tpu_custom_call.1} parent=1 // pred_check_branch
      %51 = sbr.rel (0) target = $region17
    $region16: #{tpu_custom_call.1} parent=1 // pred_region
      %s53 = ssub.s32 16, 16
      %54 = vsyncadd [#allocation9], %s53
      %s56 = sshll.u32 %s3, 4
      %s57 = int_to_ptr.vmem [resolvable:$true] %s56
      %59 = dma.vmem_to_smem %s57, 16, [#allocation10], [#allocation9]
    $region17: #{tpu_custom_call.1} parent=1 // pred_fallthru
      _
    // Predicated region
    $region18: #{tpu_custom_call.1} parent=1 // pred_check
      _
    $region19: #{tpu_custom_call.1} parent=1 // pred_check_branch
      %61 = sbr.rel (0) target = $region21
    $region20: #{tpu_custom_call.1} parent=1 // pred_region
      %s63 = ssub.s32 16, 16
      %64 = vsyncadd [#allocation12], %s63
      %s66 = sshll.u32 %s4, 4
      %s67 = int_to_ptr.vmem [resolvable:$true] %s66
      %69 = dma.vmem_to_smem %s67, 16, [#allocation11], [#allocation12]
    $region21: #{tpu_custom_call.1} parent=1 // pred_fallthru
      _
    // Predicated region
    $region22: #{tpu_custom_call.1} parent=1 // pred_check
      _
    $region23: #{tpu_custom_call.1} parent=1 // pred_check_branch
      %71 = sbr.rel (0) target = $region25
    $region24: #{tpu_custom_call.1} parent=1 // pred_region
      %s73 = ssub.s32 16, 16
      %74 = vsyncadd [#allocation12], %s73
      %s76 = sshll.u32 %s5, 4
      %s77 = int_to_ptr.vmem [resolvable:$true] %s76
      %79 = dma.vmem_to_smem %s77, 16, [#allocation13], [#allocation12]
    $region25: #{tpu_custom_call.1} parent=1 // pred_fallthru
      _
    // Predicated region
    $region26: #{tpu_custom_call.1} parent=1 // pred_check
      _
    $region27: #{tpu_custom_call.1} parent=1 // pred_check_branch
      %81 = sbr.rel (0) target = $region29
    $region28: #{tpu_custom_call.1} parent=1 // pred_region
      %s83 = ssub.s32 16, 16
      %84 = vsyncadd [#allocation15], %s83
      %s86 = sshll.u32 %s6, 4
      %s87 = int_to_ptr.vmem [resolvable:$true] %s86
      %89 = dma.vmem_to_smem %s87, 16, [#allocation14], [#allocation15]
    $region29: #{tpu_custom_call.1} parent=1 // pred_fallthru
      _
    // Predicated region
    $region30: #{tpu_custom_call.1} parent=1 // pred_check
      _
    $region31: #{tpu_custom_call.1} parent=1 // pred_check_branch
      %91 = sbr.rel (0) target = $region33
    $region32: #{tpu_custom_call.1} parent=1 // pred_region
      %92 = dma.done [#allocation4], 256
    $region33: #{tpu_custom_call.1} parent=1 // pred_fallthru
      _
    // Predicated region
    $region34: #{tpu_custom_call.1} parent=1 // pred_check
      _
    $region35: #{tpu_custom_call.1} parent=1 // pred_check_branch
      %94 = sbr.rel (0) target = $region37
    $region36: #{tpu_custom_call.1} parent=1 // pred_region
      %95 = dma.done [#allocation6], 16
    $region37: #{tpu_custom_call.1} parent=1 // pred_fallthru
      _
    // Predicated region
    $region38: #{tpu_custom_call.1} parent=1 // pred_check
      _
    $region39: #{tpu_custom_call.1} parent=1 // pred_check_branch
      %97 = sbr.rel (0) target = $region41
    $region40: #{tpu_custom_call.1} parent=1 // pred_region
      %98 = dma.done [#allocation9], 16
    $region41: #{tpu_custom_call.1} parent=1 // pred_fallthru
      _
    // Predicated region
    $region42: #{tpu_custom_call.1} parent=1 // pred_check
      _
    $region43: #{tpu_custom_call.1} parent=1 // pred_check_branch
      %100 = sbr.rel (0) target = $region45
    $region44: #{tpu_custom_call.1} parent=1 // pred_region
      %101 = dma.done [#allocation9], 16
    $region45: #{tpu_custom_call.1} parent=1 // pred_fallthru
      _
    // Predicated region
    $region46: #{tpu_custom_call.1} parent=1 // pred_check
      _
    $region47: #{tpu_custom_call.1} parent=1 // pred_check_branch
      %103 = sbr.rel (0) target = $region49
    $region48: #{tpu_custom_call.1} parent=1 // pred_region
      %104 = dma.done [#allocation12], 16
    $region49: #{tpu_custom_call.1} parent=1 // pred_fallthru
      _
    // Predicated region
    $region50: #{tpu_custom_call.1} parent=1 // pred_check
      _
    $region51: #{tpu_custom_call.1} parent=1 // pred_check_branch
      %106 = sbr.rel (0) target = $region53
    $region52: #{tpu_custom_call.1} parent=1 // pred_region
      %107 = dma.done [#allocation12], 16
    $region53: #{tpu_custom_call.1} parent=1 // pred_fallthru
      _
    // Predicated region
    $region54: #{tpu_custom_call.1} parent=1 // pred_check
      _
    $region55: #{tpu_custom_call.1} parent=1 // pred_check_branch
      %109 = sbr.rel (0) target = $region57
    $region56: #{tpu_custom_call.1} parent=1 // pred_region
      %110 = dma.done [#allocation15], 16
    $region57: #{tpu_custom_call.1} parent=1 // pred_fallthru
      _
    %111 = sfence
    %v112 = vlaneseq
    %v113 = vand.u32 %v112, 127
    %v114 = vadd.s32 %v113, 128
    %v115 = vand.u32 %v113, 15
    %v116 = vand.u32 %v114, 15
    %117 = vst [vmem:[#allocation2] sm:$0x3] 0.0
    %118 = vst [vmem:[#allocation2 + $0x8] sm:$0x3] 0.0
    %119 = vst [vmem:[#allocation2 + $0x10] sm:$0x3] 0.0
    %120 = vst [vmem:[#allocation2 + $0x18] sm:$0x3] 0.0
    %121 = vst [vmem:[#allocation2 + $0x6] sm:$0x3] 0.0
    %122 = vst [vmem:[#allocation2 + $0xe] sm:$0x3] 0.0
    %123 = vst [vmem:[#allocation2 + $0x16] sm:$0x3] 0.0
    %124 = vst [vmem:[#allocation2 + $0x1e] sm:$0x3] 0.0
    %v125 = vld [vmem:[#allocation3] ss:$4 sm:$0x3]
    %s126 = scalar_lea.vmem [#allocation3], 8
    %v127 = vld [vmem:[%s126] ss:$4 sm:$0x3]
    %s128 = scalar_lea.vmem [#allocation3], 1
    %v129 = vld [vmem:[%s128] ss:$4 sm:$0x3]
    %s130 = scalar_lea.vmem [#allocation3], 9
    %v131 = vld [vmem:[%s130] ss:$4 sm:$0x3]
    %s132 = scalar_lea.vmem [#allocation3], 2
    %v133 = vld [vmem:[%s132] ss:$4 sm:$0x3]
    %s134 = scalar_lea.vmem [#allocation3], 10
    %v135 = vld [vmem:[%s134] ss:$4 sm:$0x3]
    %s136 = scalar_lea.vmem [#allocation3], 3
    %v137 = vld [vmem:[%s136] ss:$4 sm:$0x3]
    %s138 = scalar_lea.vmem [#allocation3], 11
    %v139 = vld [vmem:[%s138] ss:$4 sm:$0x3]
    %v142 = vcombine.low %v125, %v127
    %v144 = vunpack.c.l.s4 1935823168
    %v145 = vunpack.c.0.s8 %v144
    %v146 = vlaneseq
    %v147 = vshrl.u32 %v146, 7
    %v148 = vsub.s32 %v145, %v147
    %v149 = vrot.slane %v142, %v148
    %151 = vst [vmem:[#allocation2 + $0x2] sm:$0xf] %v149
    %v154 = vcombine.low %v129, %v131
    %v156 = vunpack.c.l.s4 1935823168
    %v157 = vunpack.c.0.s8 %v156
    %v158 = vlaneseq
    %v159 = vshrl.u32 %v158, 7
    %v160 = vsub.s32 %v157, %v159
    %v161 = vrot.slane %v154, %v160
    %s163 = scalar_lea.vmem [#allocation2], 8
    %164 = vst [vmem:[%s163 + $0x2] sm:$0xf] %v161
    %v167 = vcombine.low %v133, %v135
    %v169 = vunpack.c.l.s4 1935823168
    %v170 = vunpack.c.0.s8 %v169
    %v171 = vlaneseq
    %v172 = vshrl.u32 %v171, 7
    %v173 = vsub.s32 %v170, %v172
    %v174 = vrot.slane %v167, %v173
    %s176 = scalar_lea.vmem [#allocation2], 16
    %177 = vst [vmem:[%s176 + $0x2] sm:$0xf] %v174
    %v180 = vcombine.low %v137, %v139
    %v182 = vunpack.c.l.s4 1935823168
    %v183 = vunpack.c.0.s8 %v182
    %v184 = vlaneseq
    %v185 = vshrl.u32 %v184, 7
    %v186 = vsub.s32 %v183, %v185
    %v187 = vrot.slane %v180, %v186
    %s189 = scalar_lea.vmem [#allocation2], 24
    %190 = vst [vmem:[%s189 + $0x2] sm:$0xf] %v187
    %v191 = vld [vmem:[#allocation2] sm:$0x3f]
    %s192 = sld [smem:[#allocation7]]
    %v193 = vstv %s192
    %v194 = vmul.f32 %v193, %v191
    %s195 = sld [smem:[#allocation7 + $0x24]]
    %v196 = vstv %s195
    %v197 = vmul.f32 %v196, %v191
    %v198 = vld [vmem:[%s163] sm:$0x3f]
    %s199 = sld [smem:[#allocation7 + $0x9]]
    %v200 = vstv %s199
    %v201 = vmul.f32 %v200, %v198
    %v202 = vadd.f32 %v194, %v201
    %s203 = sld [smem:[#allocation7 + $0x2d]]
    %v204 = vstv %s203
    %v205 = vmul.f32 %v204, %v198
    %v206 = vadd.f32 %v197, %v205
    %v207 = vld [vmem:[%s176] sm:$0x3f]
    %s208 = sld [smem:[#allocation7 + $0x12]]
    %v209 = vstv %s208
    %v210 = vmul.f32 %v209, %v207
    %v211 = vadd.f32 %v202, %v210
    %s212 = sld [smem:[#allocation7 + $0x36]]
    %v213 = vstv %s212
    %v214 = vmul.f32 %v213, %v207
    %v215 = vadd.f32 %v206, %v214
    %v216 = vld [vmem:[%s189] sm:$0x3f]
    %s217 = sld [smem:[#allocation7 + $0x1b]]
    %v218 = vstv %s217
    %v219 = vmul.f32 %v218, %v216
    %v220 = vadd.f32 %v211, %v219
    %s221 = sld [smem:[#allocation7 + $0x3f]]
    %v222 = vstv %s221
    %v223 = vmul.f32 %v222, %v216
    %v224 = vadd.f32 %v215, %v223
    %s225 = sld [smem:[#allocation7 + $0x3]]
    %v226 = vstv %s225
    %v227 = vmul.f32 %v226, %v191
    %229 = vrot.lane.b32.xlu0 %v227, 112
    %v230 = vpop.permute.xlu0 %229
    %v231 = vrot.slane %v230, 2
    %vm232 = vcmask 916480
    %v233 = vsel %vm232, %v230, %v231
    %v235 = vadd.f32 %v220, %v233
    %s236 = sld [smem:[#allocation7 + $0x27]]
    %v237 = vstv %s236
    %v238 = vmul.f32 %v237, %v191
    %240 = vrot.lane.b32.xlu0 %v238, 112
    %v241 = vpop.permute.xlu0 %240
    %v242 = vrot.slane %v241, 2
    %v243 = vsel %vm232, %v241, %v242
    %v245 = vadd.f32 %v224, %v243
    %s246 = sld [smem:[#allocation7 + $0xc]]
    %v247 = vstv %s246
    %v248 = vmul.f32 %v247, %v198
    %250 = vrot.lane.b32.xlu0 %v248, 112
    %v251 = vpop.permute.xlu0 %250
    %v252 = vrot.slane %v251, 2
    %v253 = vsel %vm232, %v251, %v252
    %v255 = vadd.f32 %v235, %v253
    %s256 = sld [smem:[#allocation7 + $0x30]]
    %v257 = vstv %s256
    %v258 = vmul.f32 %v257, %v198
    %260 = vrot.lane.b32.xlu0 %v258, 112
    %v261 = vpop.permute.xlu0 %260
    %v262 = vrot.slane %v261, 2
    %v263 = vsel %vm232, %v261, %v262
    %v265 = vadd.f32 %v245, %v263
    %s266 = sld [smem:[#allocation7 + $0x15]]
    %v267 = vstv %s266
    %v268 = vmul.f32 %v267, %v207
    %270 = vrot.lane.b32.xlu0 %v268, 112
    %v271 = vpop.permute.xlu0 %270
    %v272 = vrot.slane %v271, 2
    %v273 = vsel %vm232, %v271, %v272
    %v275 = vadd.f32 %v255, %v273
    %s276 = sld [smem:[#allocation7 + $0x39]]
    %v277 = vstv %s276
    %v278 = vmul.f32 %v277, %v207
    %280 = vrot.lane.b32.xlu0 %v278, 112
    %v281 = vpop.permute.xlu0 %280
    %v282 = vrot.slane %v281, 2
    %v283 = vsel %vm232, %v281, %v282
    %v285 = vadd.f32 %v265, %v283
    %s286 = sld [smem:[#allocation7 + $0x1e]]
    %v287 = vstv %s286
    %v288 = vmul.f32 %v287, %v216
    %290 = vrot.lane.b32.xlu0 %v288, 112
    %v291 = vpop.permute.xlu0 %290
    %v292 = vrot.slane %v291, 2
    %v293 = vsel %vm232, %v291, %v292
    %v295 = vadd.f32 %v275, %v293
    %s296 = sld [smem:[#allocation7 + $0x42]]
    %v297 = vstv %s296
    %v298 = vmul.f32 %v297, %v216
    %300 = vrot.lane.b32.xlu0 %v298, 112
    %v301 = vpop.permute.xlu0 %300
    %v302 = vrot.slane %v301, 2
    %v303 = vsel %vm232, %v301, %v302
    %v305 = vadd.f32 %v285, %v303
    %v306 = vld [vmem:[#allocation2 + $0x2] sm:$0x3f]
    %s307 = sld [smem:[#allocation7 + $0x6]]
    %v308 = vstv %s307
    %v309 = vmul.f32 %v308, %v306
    %311 = vrot.lane.b32.xlu0 %v309, 96
    %v312 = vpop.permute.xlu0 %311
    %v313 = vrot.slane %v312, 6
    %vm314 = vcmask 785408
    %v315 = vsel %vm314, %v313, %v312
    %v317 = vadd.f32 %v295, %v315
    %s318 = sld [smem:[#allocation7 + $0x2a]]
    %v319 = vstv %s318
    %v320 = vmul.f32 %v319, %v306
    %322 = vrot.lane.b32.xlu0 %v320, 96
    %v323 = vpop.permute.xlu0 %322
    %v324 = vrot.slane %v323, 6
    %v325 = vsel %vm314, %v324, %v323
    %v327 = vadd.f32 %v305, %v325
    %v328 = vld [vmem:[%s163 + $0x2] sm:$0x3f]
    %s329 = sld [smem:[#allocation7 + $0xf]]
    %v330 = vstv %s329
    %v331 = vmul.f32 %v330, %v328
    %333 = vrot.lane.b32.xlu0 %v331, 96
    %v334 = vpop.permute.xlu0 %333
    %v335 = vrot.slane %v334, 6
    %v336 = vsel %vm314, %v335, %v334
    %v338 = vadd.f32 %v317, %v336
    %s339 = sld [smem:[#allocation7 + $0x33]]
    %v340 = vstv %s339
    %v341 = vmul.f32 %v340, %v328
    %343 = vrot.lane.b32.xlu0 %v341, 96
    %v344 = vpop.permute.xlu0 %343
    %v345 = vrot.slane %v344, 6
    %v346 = vsel %vm314, %v345, %v344
    %v348 = vadd.f32 %v327, %v346
    %v349 = vld [vmem:[%s176 + $0x2] sm:$0x3f]
    %s350 = sld [smem:[#allocation7 + $0x18]]
    %v351 = vstv %s350
    %v352 = vmul.f32 %v351, %v349
    %354 = vrot.lane.b32.xlu0 %v352, 96
    %v355 = vpop.permute.xlu0 %354
    %v356 = vrot.slane %v355, 6
    %v357 = vsel %vm314, %v356, %v355
    %v359 = vadd.f32 %v338, %v357
    %s360 = sld [smem:[#allocation7 + $0x3c]]
    %v361 = vstv %s360
    %v362 = vmul.f32 %v361, %v349
    %364 = vrot.lane.b32.xlu0 %v362, 96
    %v365 = vpop.permute.xlu0 %364
    %v366 = vrot.slane %v365, 6
    %v367 = vsel %vm314, %v366, %v365
    %v369 = vadd.f32 %v348, %v367
    %v370 = vld [vmem:[%s189 + $0x2] sm:$0x3f]
    %s371 = sld [smem:[#allocation7 + $0x21]]
    %v372 = vstv %s371
    %v373 = vmul.f32 %v372, %v370
    %375 = vrot.lane.b32.xlu0 %v373, 96
    %v376 = vpop.permute.xlu0 %375
    %v377 = vrot.slane %v376, 6
    %v378 = vsel %vm314, %v377, %v376
    %v380 = vadd.f32 %v359, %v378
    %s381 = sld [smem:[#allocation7 + $0x45]]
    %v382 = vstv %s381
    %v383 = vmul.f32 %v382, %v370
    %385 = vrot.lane.b32.xlu0 %v383, 96
    %v386 = vpop.permute.xlu0 %385
    %v387 = vrot.slane %v386, 6
    %v388 = vsel %vm314, %v387, %v386
    %v390 = vadd.f32 %v369, %v388
    %s391 = sld [smem:[#allocation7 + $0x1]]
    %v392 = vstv %s391
    %v393 = vmul.f32 %v392, %v191
    %s394 = sld [smem:[#allocation7 + $0x25]]
    %v395 = vstv %s394
    %v396 = vmul.f32 %v395, %v191
    %s397 = sld [smem:[#allocation7 + $0xa]]
    %v398 = vstv %s397
    %v399 = vmul.f32 %v398, %v198
    %v400 = vadd.f32 %v393, %v399
    %s401 = sld [smem:[#allocation7 + $0x2e]]
    %v402 = vstv %s401
    %v403 = vmul.f32 %v402, %v198
    %v404 = vadd.f32 %v396, %v403
    %s405 = sld [smem:[#allocation7 + $0x13]]
    %v406 = vstv %s405
    %v407 = vmul.f32 %v406, %v207
    %v408 = vadd.f32 %v400, %v407
    %s409 = sld [smem:[#allocation7 + $0x37]]
    %v410 = vstv %s409
    %v411 = vmul.f32 %v410, %v207
    %v412 = vadd.f32 %v404, %v411
    %s413 = sld [smem:[#allocation7 + $0x1c]]
    %v414 = vstv %s413
    %v415 = vmul.f32 %v414, %v216
    %v416 = vadd.f32 %v408, %v415
    %s417 = sld [smem:[#allocation7 + $0x40]]
    %v418 = vstv %s417
    %v419 = vmul.f32 %v418, %v216
    %v420 = vadd.f32 %v412, %v419
    %v421 = vld [vmem:[#allocation2 + $0x2] sm:$0xf]
    %s422 = sld [smem:[#allocation7 + $0x4]]
    %v423 = vstv %s422
    %v424 = vmul.f32 %v423, %v421
    %426 = vrot.lane.b32.xlu0 %v424, 112
    %v427 = vpop.permute.xlu0 %426
    %v428 = vrot.slane %v427, 6
    %v429 = vsel %vm232, %v428, %v427
    %v431 = vadd.f32 %v416, %v429
    %s432 = sld [smem:[#allocation7 + $0x28]]
    %v433 = vstv %s432
    %v434 = vmul.f32 %v433, %v421
    %436 = vrot.lane.b32.xlu0 %v434, 112
    %v437 = vpop.permute.xlu0 %436
    %v438 = vrot.slane %v437, 6
    %v439 = vsel %vm232, %v438, %v437
    %v441 = vadd.f32 %v420, %v439
    %v442 = vld [vmem:[%s163 + $0x2] sm:$0xf]
    %s443 = sld [smem:[#allocation7 + $0xd]]
    %v444 = vstv %s443
    %v445 = vmul.f32 %v444, %v442
    %447 = vrot.lane.b32.xlu0 %v445, 112
    %v448 = vpop.permute.xlu0 %447
    %v449 = vrot.slane %v448, 6
    %v450 = vsel %vm232, %v449, %v448
    %v452 = vadd.f32 %v431, %v450
    %s453 = sld [smem:[#allocation7 + $0x31]]
    %v454 = vstv %s453
    %v455 = vmul.f32 %v454, %v442
    %457 = vrot.lane.b32.xlu0 %v455, 112
    %v458 = vpop.permute.xlu0 %457
    %v459 = vrot.slane %v458, 6
    %v460 = vsel %vm232, %v459, %v458
    %v462 = vadd.f32 %v441, %v460
    %v463 = vld [vmem:[%s176 + $0x2] sm:$0xf]
    %s464 = sld [smem:[#allocation7 + $0x16]]
    %v465 = vstv %s464
    %v466 = vmul.f32 %v465, %v463
    %468 = vrot.lane.b32.xlu0 %v466, 112
    %v469 = vpop.permute.xlu0 %468
    %v470 = vrot.slane %v469, 6
    %v471 = vsel %vm232, %v470, %v469
    %v473 = vadd.f32 %v452, %v471
    %s474 = sld [smem:[#allocation7 + $0x3a]]
    %v475 = vstv %s474
    %v476 = vmul.f32 %v475, %v463
    %478 = vrot.lane.b32.xlu0 %v476, 112
    %v479 = vpop.permute.xlu0 %478
    %v480 = vrot.slane %v479, 6
    %v481 = vsel %vm232, %v480, %v479
    %v483 = vadd.f32 %v462, %v481
    %v484 = vld [vmem:[%s189 + $0x2] sm:$0xf]
    %s485 = sld [smem:[#allocation7 + $0x1f]]
    %v486 = vstv %s485
    %v487 = vmul.f32 %v486, %v484
    %489 = vrot.lane.b32.xlu0 %v487, 112
    %v490 = vpop.permute.xlu0 %489
    %v491 = vrot.slane %v490, 6
    %v492 = vsel %vm232, %v491, %v490
    %v494 = vadd.f32 %v473, %v492
    %s495 = sld [smem:[#allocation7 + $0x43]]
    %v496 = vstv %s495
    %v497 = vmul.f32 %v496, %v484
    %499 = vrot.lane.b32.xlu0 %v497, 112
    %v500 = vpop.permute.xlu0 %499
    %v501 = vrot.slane %v500, 6
    %v502 = vsel %vm232, %v501, %v500
    %v504 = vadd.f32 %v483, %v502
    %s505 = sld [smem:[#allocation7 + $0x7]]
    %v506 = vstv %s505
    %v507 = vmul.f32 %v506, %v306
    %509 = vrot.lane.b32.xlu0 %v507, 96
    %v510 = vpop.permute.xlu0 %509
    %v511 = vrot.slane %v510, 6
    %v512 = vsel %vm314, %v511, %v510
    %v514 = vadd.f32 %v494, %v512
    %s515 = sld [smem:[#allocation7 + $0x2b]]
    %v516 = vstv %s515
    %v517 = vmul.f32 %v516, %v306
    %519 = vrot.lane.b32.xlu0 %v517, 96
    %v520 = vpop.permute.xlu0 %519
    %v521 = vrot.slane %v520, 6
    %v522 = vsel %vm314, %v521, %v520
    %v524 = vadd.f32 %v504, %v522
    %s525 = sld [smem:[#allocation7 + $0x10]]
    %v526 = vstv %s525
    %v527 = vmul.f32 %v526, %v328
    %529 = vrot.lane.b32.xlu0 %v527, 96
    %v530 = vpop.permute.xlu0 %529
    %v531 = vrot.slane %v530, 6
    %v532 = vsel %vm314, %v531, %v530
    %v534 = vadd.f32 %v514, %v532
    %s535 = sld [smem:[#allocation7 + $0x34]]
    %v536 = vstv %s535
    %v537 = vmul.f32 %v536, %v328
    %539 = vrot.lane.b32.xlu0 %v537, 96
    %v540 = vpop.permute.xlu0 %539
    %v541 = vrot.slane %v540, 6
    %v542 = vsel %vm314, %v541, %v540
    %v544 = vadd.f32 %v524, %v542
    %s545 = sld [smem:[#allocation7 + $0x19]]
    %v546 = vstv %s545
    %v547 = vmul.f32 %v546, %v349
    %549 = vrot.lane.b32.xlu0 %v547, 96
    %v550 = vpop.permute.xlu0 %549
    %v551 = vrot.slane %v550, 6
    %v552 = vsel %vm314, %v551, %v550
    %v554 = vadd.f32 %v534, %v552
    %s555 = sld [smem:[#allocation7 + $0x3d]]
    %v556 = vstv %s555
    %v557 = vmul.f32 %v556, %v349
    %559 = vrot.lane.b32.xlu0 %v557, 96
    %v560 = vpop.permute.xlu0 %559
    %v561 = vrot.slane %v560, 6
    %v562 = vsel %vm314, %v561, %v560
    %v564 = vadd.f32 %v544, %v562
    %s565 = sld [smem:[#allocation7 + $0x22]]
    %v566 = vstv %s565
    %v567 = vmul.f32 %v566, %v370
    %569 = vrot.lane.b32.xlu0 %v567, 96
    %v570 = vpop.permute.xlu0 %569
    %v571 = vrot.slane %v570, 6
    %v572 = vsel %vm314, %v571, %v570
    %v574 = vadd.f32 %v554, %v572
    %s575 = sld [smem:[#allocation7 + $0x46]]
    %v576 = vstv %s575
    %v577 = vmul.f32 %v576, %v370
    %579 = vrot.lane.b32.xlu0 %v577, 96
    %v580 = vpop.permute.xlu0 %579
    %v581 = vrot.slane %v580, 6
    %v582 = vsel %vm314, %v581, %v580
    %v584 = vadd.f32 %v564, %v582
    %s585 = sld [smem:[#allocation7 + $0x2]]
    %v586 = vstv %s585
    %v587 = vmul.f32 %v586, %v191
    %s588 = sld [smem:[#allocation7 + $0x26]]
    %v589 = vstv %s588
    %v590 = vmul.f32 %v589, %v191
    %s591 = sld [smem:[#allocation7 + $0xb]]
    %v592 = vstv %s591
    %v593 = vmul.f32 %v592, %v198
    %v594 = vadd.f32 %v587, %v593
    %s595 = sld [smem:[#allocation7 + $0x2f]]
    %v596 = vstv %s595
    %v597 = vmul.f32 %v596, %v198
    %v598 = vadd.f32 %v590, %v597
    %s599 = sld [smem:[#allocation7 + $0x14]]
    %v600 = vstv %s599
    %v601 = vmul.f32 %v600, %v207
    %v602 = vadd.f32 %v594, %v601
    %s603 = sld [smem:[#allocation7 + $0x38]]
    %v604 = vstv %s603
    %v605 = vmul.f32 %v604, %v207
    %v606 = vadd.f32 %v598, %v605
    %s607 = sld [smem:[#allocation7 + $0x1d]]
    %v608 = vstv %s607
    %v609 = vmul.f32 %v608, %v216
    %v610 = vadd.f32 %v602, %v609
    %s611 = sld [smem:[#allocation7 + $0x41]]
    %v612 = vstv %s611
    %v613 = vmul.f32 %v612, %v216
    %v614 = vadd.f32 %v606, %v613
    %s615 = sld [smem:[#allocation7 + $0x5]]
    %v616 = vstv %s615
    %v617 = vmul.f32 %v616, %v306
    %619 = vrot.lane.b32.xlu0 %v617, 112
    %v620 = vpop.permute.xlu0 %619
    %v621 = vrot.slane %v620, 6
    %v622 = vsel %vm232, %v621, %v620
    %v624 = vadd.f32 %v610, %v622
    %s625 = sld [smem:[#allocation7 + $0x29]]
    %v626 = vstv %s625
    %v627 = vmul.f32 %v626, %v306
    %629 = vrot.lane.b32.xlu0 %v627, 112
    %v630 = vpop.permute.xlu0 %629
    %v631 = vrot.slane %v630, 6
    %v632 = vsel %vm232, %v631, %v630
    %v634 = vadd.f32 %v614, %v632
    %s635 = sld [smem:[#allocation7 + $0xe]]
    %v636 = vstv %s635
    %v637 = vmul.f32 %v636, %v328
    %639 = vrot.lane.b32.xlu0 %v637, 112
    %v640 = vpop.permute.xlu0 %639
    %v641 = vrot.slane %v640, 6
    %v642 = vsel %vm232, %v641, %v640
    %v644 = vadd.f32 %v624, %v642
    %s645 = sld [smem:[#allocation7 + $0x32]]
    %v646 = vstv %s645
    %v647 = vmul.f32 %v646, %v328
    %649 = vrot.lane.b32.xlu0 %v647, 112
    %v650 = vpop.permute.xlu0 %649
    %v651 = vrot.slane %v650, 6
    %v652 = vsel %vm232, %v651, %v650
    %v654 = vadd.f32 %v634, %v652
    %s655 = sld [smem:[#allocation7 + $0x17]]
    %v656 = vstv %s655
    %v657 = vmul.f32 %v656, %v349
    %659 = vrot.lane.b32.xlu0 %v657, 112
    %v660 = vpop.permute.xlu0 %659
    %v661 = vrot.slane %v660, 6
    %v662 = vsel %vm232, %v661, %v660
    %v664 = vadd.f32 %v644, %v662
    %s665 = sld [smem:[#allocation7 + $0x3b]]
    %v666 = vstv %s665
    %v667 = vmul.f32 %v666, %v349
    %669 = vrot.lane.b32.xlu0 %v667, 112
    %v670 = vpop.permute.xlu0 %669
    %v671 = vrot.slane %v670, 6
    %v672 = vsel %vm232, %v671, %v670
    %v674 = vadd.f32 %v654, %v672
    %s675 = sld [smem:[#allocation7 + $0x20]]
    %v676 = vstv %s675
    %v677 = vmul.f32 %v676, %v370
    %679 = vrot.lane.b32.xlu0 %v677, 112
    %v680 = vpop.permute.xlu0 %679
    %v681 = vrot.slane %v680, 6
    %v682 = vsel %vm232, %v681, %v680
    %v684 = vadd.f32 %v664, %v682
    %s685 = sld [smem:[#allocation7 + $0x44]]
    %v686 = vstv %s685
    %v687 = vmul.f32 %v686, %v370
    %689 = vrot.lane.b32.xlu0 %v687, 112
    %v690 = vpop.permute.xlu0 %689
    %v691 = vrot.slane %v690, 6
    %v692 = vsel %vm232, %v691, %v690
    %v694 = vadd.f32 %v674, %v692
    %s695 = sld [smem:[#allocation7 + $0x8]]
    %v696 = vstv %s695
    %v697 = vmul.f32 %v696, %v306
    %699 = vrot.lane.b32.xlu0 %v697, 96
    %v700 = vpop.permute.xlu0 %699
    %v701 = vrot.slane %v700, 6
    %v702 = vsel %vm314, %v701, %v700
    %v704 = vadd.f32 %v684, %v702
    %s705 = sld [smem:[#allocation7 + $0x2c]]
    %v706 = vstv %s705
    %v707 = vmul.f32 %v706, %v306
    %709 = vrot.lane.b32.xlu0 %v707, 96
    %v710 = vpop.permute.xlu0 %709
    %v711 = vrot.slane %v710, 6
    %v712 = vsel %vm314, %v711, %v710
    %v714 = vadd.f32 %v694, %v712
    %s715 = sld [smem:[#allocation7 + $0x11]]
    %v716 = vstv %s715
    %v717 = vmul.f32 %v716, %v328
    %719 = vrot.lane.b32.xlu0 %v717, 96
    %v720 = vpop.permute.xlu0 %719
    %v721 = vrot.slane %v720, 6
    %v722 = vsel %vm314, %v721, %v720
    %v724 = vadd.f32 %v704, %v722
    %s725 = sld [smem:[#allocation7 + $0x35]]
    %v726 = vstv %s725
    %v727 = vmul.f32 %v726, %v328
    %729 = vrot.lane.b32.xlu0 %v727, 96
    %v730 = vpop.permute.xlu0 %729
    %v731 = vrot.slane %v730, 6
    %v732 = vsel %vm314, %v731, %v730
    %v734 = vadd.f32 %v714, %v732
    %s735 = sld [smem:[#allocation7 + $0x1a]]
    %v736 = vstv %s735
    %v737 = vmul.f32 %v736, %v349
    %739 = vrot.lane.b32.xlu0 %v737, 96
    %v740 = vpop.permute.xlu0 %739
    %v741 = vrot.slane %v740, 6
    %v742 = vsel %vm314, %v741, %v740
    %v744 = vadd.f32 %v724, %v742
    %s745 = sld [smem:[#allocation7 + $0x3e]]
    %v746 = vstv %s745
    %v747 = vmul.f32 %v746, %v349
    %749 = vrot.lane.b32.xlu0 %v747, 96
    %v750 = vpop.permute.xlu0 %749
    %v751 = vrot.slane %v750, 6
    %v752 = vsel %vm314, %v751, %v750
    %v754 = vadd.f32 %v734, %v752
    %s755 = sld [smem:[#allocation7 + $0x23]]
    %v756 = vstv %s755
    %v757 = vmul.f32 %v756, %v370
    %759 = vrot.lane.b32.xlu0 %v757, 96
    %v760 = vpop.permute.xlu0 %759
    %v761 = vrot.slane %v760, 6
    %v762 = vsel %vm314, %v761, %v760
    %v764 = vadd.f32 %v744, %v762
    %s765 = sld [smem:[#allocation7 + $0x47]]
    %v766 = vstv %s765
    %v767 = vmul.f32 %v766, %v370
    %769 = vrot.lane.b32.xlu0 %v767, 96
    %v770 = vpop.permute.xlu0 %769
    %v771 = vrot.slane %v770, 6
    %v772 = vsel %vm314, %v771, %v770
    %v774 = vadd.f32 %v754, %v772
    %vm775 = vcmp.ge.s32.totalorder %v115, 1
    %vm776 = vcmp.ge.s32.totalorder %v116, 1
    %vm777 = vcmp.lt.s32.totalorder %v115, 16
    %vm778 = vcmp.lt.s32.totalorder %v116, 16
    %vm779 = vmand %vm775, %vm777
    %vm780 = vmand %vm776, %vm778
    %v781 = vsel %vm779, 1, 0
    %v782 = vsel %vm780, 1, 0
    %vm783 = vcmp.eq.s32.totalorder %v781, 1
    %vm784 = vcmp.eq.s32.totalorder %v782, 1
    %v786 = vcombine.high %v380, %v380
    %v788 = vunpack.c.l.s4 1983009808
    %v789 = vunpack.c.0.s8 %v788
    %v790 = vlaneseq
    %v791 = vshrl.u32 %v790, 7
    %v792 = vsub.s32 %v789, %v791
    %v793 = vrot.slane %v380, %v792
    %v795 = vunpack.c.l.s4 1983009808
    %v796 = vunpack.c.0.s8 %v795
    %v797 = vlaneseq
    %v798 = vshrl.u32 %v797, 7
    %v799 = vsub.s32 %v796, %v798
    %v800 = vrot.slane %v786, %v799
    %v801 = vcombine.high %v793, %v793
    %802 = vrot.lane.b32.xlu0 %v793, 17
    %v803 = vpop.permute.xlu0 %802
    %804 = vrot.lane.b32.xlu0 %v801, 17
    %v805 = vpop.permute.xlu0 %804
    %806 = vrot.lane.b32.xlu0 %v800, 17
    %v807 = vpop.permute.xlu0 %806
    %vm808 = vcmask 138240
    %v809 = vsel %vm808, %v803, %v805
    %v810 = vsel %vm808, %v805, %v807
    %v813 = vsel %vm783, %v809, 0.0
    %v814 = vsel %vm784, %v810, 0.0
    %vm815 = vcmp.ge.s32.totalorder %v115, 0
    %vm816 = vcmp.ge.s32.totalorder %v116, 0
    %vm817 = vcmp.lt.s32.totalorder %v115, 15
    %vm818 = vcmp.lt.s32.totalorder %v116, 15
    %vm819 = vmand %vm815, %vm817
    %vm820 = vmand %vm816, %vm818
    %v821 = vsel %vm819, 1, 0
    %v822 = vsel %vm820, 1, 0
    %vm823 = vcmp.eq.s32.totalorder %v821, 1
    %vm824 = vcmp.eq.s32.totalorder %v822, 1
    %v826 = vcombine.high %v764, %v764
    %v828 = vunpack.c.l.s4 1983009808
    %v829 = vunpack.c.0.s8 %v828
    %v830 = vlaneseq
    %v831 = vshrl.u32 %v830, 7
    %v832 = vsub.s32 %v829, %v831
    %v833 = vrot.slane %v764, %v832
    %v835 = vunpack.c.l.s4 1983009808
    %v836 = vunpack.c.0.s8 %v835
    %v837 = vlaneseq
    %v838 = vshrl.u32 %v837, 7
    %v839 = vsub.s32 %v836, %v838
    %v840 = vrot.slane %v826, %v839
    %v841 = vcombine.high %v833, %v833
    %842 = vrot.lane.b32.xlu0 %v833, 15
    %v843 = vpop.permute.xlu0 %842
    %844 = vrot.lane.b32.xlu0 %v841, 15
    %v845 = vpop.permute.xlu0 %844
    %846 = vrot.lane.b32.xlu0 %v840, 15
    %v847 = vpop.permute.xlu0 %846
    %vm848 = vcmask 121856
    %v849 = vsel %vm848, %v843, %v845
    %v850 = vsel %vm848, %v845, %v847
    %v853 = vsel %vm823, %v849, 0.0
    %v854 = vsel %vm824, %v850, 0.0
    %s855 = sld [smem:[#allocation8]]
    %v857 = vcombine.high %v574, %v574
    %v859 = vunpack.c.l.s4 1983009808
    %v860 = vunpack.c.0.s8 %v859
    %v861 = vlaneseq
    %v862 = vshrl.u32 %v861, 7
    %v863 = vsub.s32 %v860, %v862
    %v864 = vrot.slane %v574, %v863
    %v866 = vunpack.c.l.s4 1983009808
    %v867 = vunpack.c.0.s8 %v866
    %v868 = vlaneseq
    %v869 = vshrl.u32 %v868, 7
    %v870 = vsub.s32 %v867, %v869
    %v871 = vrot.slane %v857, %v870
    %v872 = vcombine.high %v864, %v864
    %873 = vrot.lane.b32.xlu0 %v864, 16
    %v874 = vpop.permute.xlu0 %873
    %875 = vrot.lane.b32.xlu0 %v872, 16
    %v876 = vpop.permute.xlu0 %875
    %877 = vrot.lane.b32.xlu0 %v871, 16
    %v878 = vpop.permute.xlu0 %877
    %vm879 = vcmask 130048
    %v880 = vsel %vm879, %v874, %v876
    %v881 = vsel %vm879, %v876, %v878
    %v884 = vadd.f32 %v813, %v880
    %v885 = vadd.f32 %v814, %v881
    %v886 = vadd.f32 %v884, %v853
    %v887 = vadd.f32 %v885, %v854
    %v888 = vstv %s855
    %v889 = vadd.f32 %v888, %v886
    %v890 = vadd.f32 %v888, %v887
    %v892 = vcombine.high %v390, %v390
    %v894 = vunpack.c.l.s4 1983009808
    %v895 = vunpack.c.0.s8 %v894
    %v896 = vlaneseq
    %v897 = vshrl.u32 %v896, 7
    %v898 = vsub.s32 %v895, %v897
    %v899 = vrot.slane %v390, %v898
    %v901 = vunpack.c.l.s4 1983009808
    %v902 = vunpack.c.0.s8 %v901
    %v903 = vlaneseq
    %v904 = vshrl.u32 %v903, 7
    %v905 = vsub.s32 %v902, %v904
    %v906 = vrot.slane %v892, %v905
    %v907 = vcombine.high %v899, %v899
    %908 = vrot.lane.b32.xlu0 %v899, 17
    %v909 = vpop.permute.xlu0 %908
    %910 = vrot.lane.b32.xlu0 %v907, 17
    %v911 = vpop.permute.xlu0 %910
    %912 = vrot.lane.b32.xlu0 %v906, 17
    %v913 = vpop.permute.xlu0 %912
    %v914 = vsel %vm808, %v909, %v911
    %v915 = vsel %vm808, %v911, %v913
    %v918 = vsel %vm783, %v914, 0.0
    %v919 = vsel %vm784, %v915, 0.0
    %v921 = vcombine.high %v774, %v774
    %v923 = vunpack.c.l.s4 1983009808
    %v924 = vunpack.c.0.s8 %v923
    %v925 = vlaneseq
    %v926 = vshrl.u32 %v925, 7
    %v927 = vsub.s32 %v924, %v926
    %v928 = vrot.slane %v774, %v927
    %v930 = vunpack.c.l.s4 1983009808
    %v931 = vunpack.c.0.s8 %v930
    %v932 = vlaneseq
    %v933 = vshrl.u32 %v932, 7
    %v934 = vsub.s32 %v931, %v933
    %v935 = vrot.slane %v921, %v934
    %v936 = vcombine.high %v928, %v928
    %937 = vrot.lane.b32.xlu0 %v928, 15
    %v938 = vpop.permute.xlu0 %937
    %939 = vrot.lane.b32.xlu0 %v936, 15
    %v940 = vpop.permute.xlu0 %939
    %941 = vrot.lane.b32.xlu0 %v935, 15
    %v942 = vpop.permute.xlu0 %941
    %v943 = vsel %vm848, %v938, %v940
    %v944 = vsel %vm848, %v940, %v942
    %v947 = vsel %vm823, %v943, 0.0
    %v948 = vsel %vm824, %v944, 0.0
    %s949 = sld [smem:[#allocation8 + $0x1]]
    %v951 = vcombine.high %v584, %v584
    %v953 = vunpack.c.l.s4 1983009808
    %v954 = vunpack.c.0.s8 %v953
    %v955 = vlaneseq
    %v956 = vshrl.u32 %v955, 7
    %v957 = vsub.s32 %v954, %v956
    %v958 = vrot.slane %v584, %v957
    %v960 = vunpack.c.l.s4 1983009808
    %v961 = vunpack.c.0.s8 %v960
    %v962 = vlaneseq
    %v963 = vshrl.u32 %v962, 7
    %v964 = vsub.s32 %v961, %v963
    %v965 = vrot.slane %v951, %v964
    %v966 = vcombine.high %v958, %v958
    %967 = vrot.lane.b32.xlu0 %v958, 16
    %v968 = vpop.permute.xlu0 %967
    %969 = vrot.lane.b32.xlu0 %v966, 16
    %v970 = vpop.permute.xlu0 %969
    %971 = vrot.lane.b32.xlu0 %v965, 16
    %v972 = vpop.permute.xlu0 %971
    %v973 = vsel %vm879, %v968, %v970
    %v974 = vsel %vm879, %v970, %v972
    %v977 = vadd.f32 %v918, %v973
    %v978 = vadd.f32 %v919, %v974
    %v979 = vadd.f32 %v977, %v947
    %v980 = vadd.f32 %v978, %v948
    %v981 = vstv %s949
    %v982 = vadd.f32 %v981, %v979
    %v983 = vadd.f32 %v981, %v980
    %v986 = vcombine.low %v889, %v890
    %v988 = vunpack.c.l.s4 1983009808
    %v989 = vunpack.c.0.s8 %v988
    %v990 = vlaneseq
    %v991 = vshrl.u32 %v990, 7
    %v992 = vsub.s32 %v989, %v991
    %v993 = vrot.slane %v986, %v992
    %995 = vst [vmem:[#allocation2 + $0x2] sm:$0xf] %v993
    %v998 = vcombine.low %v982, %v983
    %v1000 = vunpack.c.l.s4 1983009808
    %v1001 = vunpack.c.0.s8 %v1000
    %v1002 = vlaneseq
    %v1003 = vshrl.u32 %v1002, 7
    %v1004 = vsub.s32 %v1001, %v1003
    %v1005 = vrot.slane %v998, %v1004
    %1007 = vst [vmem:[%s163 + $0x2] sm:$0xf] %v1005
    %v1008 = vld [vmem:[#allocation2] sm:$0x3f]
    %s1009 = sld [smem:[#allocation10]]
    %v1010 = vstv %s1009
    %v1011 = vmul.f32 %v1010, %v1008
    %s1012 = sld [smem:[#allocation10 + $0x12]]
    %v1013 = vstv %s1012
    %v1014 = vmul.f32 %v1013, %v1008
    %v1015 = vld [vmem:[%s163] sm:$0x3f]
    %s1016 = sld [smem:[#allocation10 + $0x9]]
    %v1017 = vstv %s1016
    %v1018 = vmul.f32 %v1017, %v1015
    %v1019 = vadd.f32 %v1011, %v1018
    %s1020 = sld [smem:[#allocation10 + $0x1b]]
    %v1021 = vstv %s1020
    %v1022 = vmul.f32 %v1021, %v1015
    %v1023 = vadd.f32 %v1014, %v1022
    %s1024 = sld [smem:[#allocation10 + $0x3]]
    %v1025 = vstv %s1024
    %v1026 = vmul.f32 %v1025, %v1008
    %1028 = vrot.lane.b32.xlu0 %v1026, 112
    %v1029 = vpop.permute.xlu0 %1028
    %v1030 = vrot.slane %v1029, 2
    %v1031 = vsel %vm232, %v1029, %v1030
    %v1033 = vadd.f32 %v1019, %v1031
    %s1034 = sld [smem:[#allocation10 + $0x15]]
    %v1035 = vstv %s1034
    %v1036 = vmul.f32 %v1035, %v1008
    %1038 = vrot.lane.b32.xlu0 %v1036, 112
    %v1039 = vpop.permute.xlu0 %1038
    %v1040 = vrot.slane %v1039, 2
    %v1041 = vsel %vm232, %v1039, %v1040
    %v1043 = vadd.f32 %v1023, %v1041
    %s1044 = sld [smem:[#allocation10 + $0xc]]
    %v1045 = vstv %s1044
    %v1046 = vmul.f32 %v1045, %v1015
    %1048 = vrot.lane.b32.xlu0 %v1046, 112
    %v1049 = vpop.permute.xlu0 %1048
    %v1050 = vrot.slane %v1049, 2
    %v1051 = vsel %vm232, %v1049, %v1050
    %v1053 = vadd.f32 %v1033, %v1051
    %s1054 = sld [smem:[#allocation10 + $0x1e]]
    %v1055 = vstv %s1054
    %v1056 = vmul.f32 %v1055, %v1015
    %1058 = vrot.lane.b32.xlu0 %v1056, 112
    %v1059 = vpop.permute.xlu0 %1058
    %v1060 = vrot.slane %v1059, 2
    %v1061 = vsel %vm232, %v1059, %v1060
    %v1063 = vadd.f32 %v1043, %v1061
    %v1064 = vld [vmem:[#allocation2 + $0x2] sm:$0x3f]
    %s1065 = sld [smem:[#allocation10 + $0x6]]
    %v1066 = vstv %s1065
    %v1067 = vmul.f32 %v1066, %v1064
    %1069 = vrot.lane.b32.xlu0 %v1067, 96
    %v1070 = vpop.permute.xlu0 %1069
    %v1071 = vrot.slane %v1070, 6
    %v1072 = vsel %vm314, %v1071, %v1070
    %v1074 = vadd.f32 %v1053, %v1072
    %s1075 = sld [smem:[#allocation10 + $0x18]]
    %v1076 = vstv %s1075
    %v1077 = vmul.f32 %v1076, %v1064
    %1079 = vrot.lane.b32.xlu0 %v1077, 96
    %v1080 = vpop.permute.xlu0 %1079
    %v1081 = vrot.slane %v1080, 6
    %v1082 = vsel %vm314, %v1081, %v1080
    %v1084 = vadd.f32 %v1063, %v1082
    %v1085 = vld [vmem:[%s163 + $0x2] sm:$0x3f]
    %s1086 = sld [smem:[#allocation10 + $0xf]]
    %v1087 = vstv %s1086
    %v1088 = vmul.f32 %v1087, %v1085
    %1090 = vrot.lane.b32.xlu0 %v1088, 96
    %v1091 = vpop.permute.xlu0 %1090
    %v1092 = vrot.slane %v1091, 6
    %v1093 = vsel %vm314, %v1092, %v1091
    %v1095 = vadd.f32 %v1074, %v1093
    %s1096 = sld [smem:[#allocation10 + $0x21]]
    %v1097 = vstv %s1096
    %v1098 = vmul.f32 %v1097, %v1085
    %1100 = vrot.lane.b32.xlu0 %v1098, 96
    %v1101 = vpop.permute.xlu0 %1100
    %v1102 = vrot.slane %v1101, 6
    %v1103 = vsel %vm314, %v1102, %v1101
    %v1105 = vadd.f32 %v1084, %v1103
    %s1106 = sld [smem:[#allocation10 + $0x1]]
    %v1107 = vstv %s1106
    %v1108 = vmul.f32 %v1107, %v1008
    %s1109 = sld [smem:[#allocation10 + $0x13]]
    %v1110 = vstv %s1109
    %v1111 = vmul.f32 %v1110, %v1008
    %s1112 = sld [smem:[#allocation10 + $0xa]]
    %v1113 = vstv %s1112
    %v1114 = vmul.f32 %v1113, %v1015
    %v1115 = vadd.f32 %v1108, %v1114
    %s1116 = sld [smem:[#allocation10 + $0x1c]]
    %v1117 = vstv %s1116
    %v1118 = vmul.f32 %v1117, %v1015
    %v1119 = vadd.f32 %v1111, %v1118
    %v1120 = vld [vmem:[#allocation2 + $0x2] sm:$0xf]
    %s1121 = sld [smem:[#allocation10 + $0x4]]
    %v1122 = vstv %s1121
    %v1123 = vmul.f32 %v1122, %v1120
    %1125 = vrot.lane.b32.xlu0 %v1123, 112
    %v1126 = vpop.permute.xlu0 %1125
    %v1127 = vrot.slane %v1126, 6
    %v1128 = vsel %vm232, %v1127, %v1126
    %v1130 = vadd.f32 %v1115, %v1128
    %s1131 = sld [smem:[#allocation10 + $0x16]]
    %v1132 = vstv %s1131
    %v1133 = vmul.f32 %v1132, %v1120
    %1135 = vrot.lane.b32.xlu0 %v1133, 112
    %v1136 = vpop.permute.xlu0 %1135
    %v1137 = vrot.slane %v1136, 6
    %v1138 = vsel %vm232, %v1137, %v1136
    %v1140 = vadd.f32 %v1119, %v1138
    %v1141 = vld [vmem:[%s163 + $0x2] sm:$0xf]
    %s1142 = sld [smem:[#allocation10 + $0xd]]
    %v1143 = vstv %s1142
    %v1144 = vmul.f32 %v1143, %v1141
    %1146 = vrot.lane.b32.xlu0 %v1144, 112
    %v1147 = vpop.permute.xlu0 %1146
    %v1148 = vrot.slane %v1147, 6
    %v1149 = vsel %vm232, %v1148, %v1147
    %v1151 = vadd.f32 %v1130, %v1149
    %s1152 = sld [smem:[#allocation10 + $0x1f]]
    %v1153 = vstv %s1152
    %v1154 = vmul.f32 %v1153, %v1141
    %1156 = vrot.lane.b32.xlu0 %v1154, 112
    %v1157 = vpop.permute.xlu0 %1156
    %v1158 = vrot.slane %v1157, 6
    %v1159 = vsel %vm232, %v1158, %v1157
    %v1161 = vadd.f32 %v1140, %v1159
    %s1162 = sld [smem:[#allocation10 + $0x7]]
    %v1163 = vstv %s1162
    %v1164 = vmul.f32 %v1163, %v1064
    %1166 = vrot.lane.b32.xlu0 %v1164, 96
    %v1167 = vpop.permute.xlu0 %1166
    %v1168 = vrot.slane %v1167, 6
    %v1169 = vsel %vm314, %v1168, %v1167
    %v1171 = vadd.f32 %v1151, %v1169
    %s1172 = sld [smem:[#allocation10 + $0x19]]
    %v1173 = vstv %s1172
    %v1174 = vmul.f32 %v1173, %v1064
    %1176 = vrot.lane.b32.xlu0 %v1174, 96
    %v1177 = vpop.permute.xlu0 %1176
    %v1178 = vrot.slane %v1177, 6
    %v1179 = vsel %vm314, %v1178, %v1177
    %v1181 = vadd.f32 %v1161, %v1179
    %s1182 = sld [smem:[#allocation10 + $0x10]]
    %v1183 = vstv %s1182
    %v1184 = vmul.f32 %v1183, %v1085
    %1186 = vrot.lane.b32.xlu0 %v1184, 96
    %v1187 = vpop.permute.xlu0 %1186
    %v1188 = vrot.slane %v1187, 6
    %v1189 = vsel %vm314, %v1188, %v1187
    %v1191 = vadd.f32 %v1171, %v1189
    %s1192 = sld [smem:[#allocation10 + $0x22]]
    %v1193 = vstv %s1192
    %v1194 = vmul.f32 %v1193, %v1085
    %1196 = vrot.lane.b32.xlu0 %v1194, 96
    %v1197 = vpop.permute.xlu0 %1196
    %v1198 = vrot.slane %v1197, 6
    %v1199 = vsel %vm314, %v1198, %v1197
    %v1201 = vadd.f32 %v1181, %v1199
    %s1202 = sld [smem:[#allocation10 + $0x2]]
    %v1203 = vstv %s1202
    %v1204 = vmul.f32 %v1203, %v1008
    %s1205 = sld [smem:[#allocation10 + $0x14]]
    %v1206 = vstv %s1205
    %v1207 = vmul.f32 %v1206, %v1008
    %s1208 = sld [smem:[#allocation10 + $0xb]]
    %v1209 = vstv %s1208
    %v1210 = vmul.f32 %v1209, %v1015
    %v1211 = vadd.f32 %v1204, %v1210
    %s1212 = sld [smem:[#allocation10 + $0x1d]]
    %v1213 = vstv %s1212
    %v1214 = vmul.f32 %v1213, %v1015
    %v1215 = vadd.f32 %v1207, %v1214
    %s1216 = sld [smem:[#allocation10 + $0x5]]
    %v1217 = vstv %s1216
    %v1218 = vmul.f32 %v1217, %v1064
    %1220 = vrot.lane.b32.xlu0 %v1218, 112
    %v1221 = vpop.permute.xlu0 %1220
    %v1222 = vrot.slane %v1221, 6
    %v1223 = vsel %vm232, %v1222, %v1221
    %v1225 = vadd.f32 %v1211, %v1223
    %s1226 = sld [smem:[#allocation10 + $0x17]]
    %v1227 = vstv %s1226
    %v1228 = vmul.f32 %v1227, %v1064
    %1230 = vrot.lane.b32.xlu0 %v1228, 112
    %v1231 = vpop.permute.xlu0 %1230
    %v1232 = vrot.slane %v1231, 6
    %v1233 = vsel %vm232, %v1232, %v1231
    %v1235 = vadd.f32 %v1215, %v1233
    %s1236 = sld [smem:[#allocation10 + $0xe]]
    %v1237 = vstv %s1236
    %v1238 = vmul.f32 %v1237, %v1085
    %1240 = vrot.lane.b32.xlu0 %v1238, 112
    %v1241 = vpop.permute.xlu0 %1240
    %v1242 = vrot.slane %v1241, 6
    %v1243 = vsel %vm232, %v1242, %v1241
    %v1245 = vadd.f32 %v1225, %v1243
    %s1246 = sld [smem:[#allocation10 + $0x20]]
    %v1247 = vstv %s1246
    %v1248 = vmul.f32 %v1247, %v1085
    %1250 = vrot.lane.b32.xlu0 %v1248, 112
    %v1251 = vpop.permute.xlu0 %1250
    %v1252 = vrot.slane %v1251, 6
    %v1253 = vsel %vm232, %v1252, %v1251
    %v1255 = vadd.f32 %v1235, %v1253
    %s1256 = sld [smem:[#allocation10 + $0x8]]
    %v1257 = vstv %s1256
    %v1258 = vmul.f32 %v1257, %v1064
    %1260 = vrot.lane.b32.xlu0 %v1258, 96
    %v1261 = vpop.permute.xlu0 %1260
    %v1262 = vrot.slane %v1261, 6
    %v1263 = vsel %vm314, %v1262, %v1261
    %v1265 = vadd.f32 %v1245, %v1263
    %s1266 = sld [smem:[#allocation10 + $0x1a]]
    %v1267 = vstv %s1266
    %v1268 = vmul.f32 %v1267, %v1064
    %1270 = vrot.lane.b32.xlu0 %v1268, 96
    %v1271 = vpop.permute.xlu0 %1270
    %v1272 = vrot.slane %v1271, 6
    %v1273 = vsel %vm314, %v1272, %v1271
    %v1275 = vadd.f32 %v1255, %v1273
    %s1276 = sld [smem:[#allocation10 + $0x11]]
    %v1277 = vstv %s1276
    %v1278 = vmul.f32 %v1277, %v1085
    %1280 = vrot.lane.b32.xlu0 %v1278, 96
    %v1281 = vpop.permute.xlu0 %1280
    %v1282 = vrot.slane %v1281, 6
    %v1283 = vsel %vm314, %v1282, %v1281
    %v1285 = vadd.f32 %v1265, %v1283
    %s1286 = sld [smem:[#allocation10 + $0x23]]
    %v1287 = vstv %s1286
    %v1288 = vmul.f32 %v1287, %v1085
    %1290 = vrot.lane.b32.xlu0 %v1288, 96
    %v1291 = vpop.permute.xlu0 %1290
    %v1292 = vrot.slane %v1291, 6
    %v1293 = vsel %vm314, %v1292, %v1291
    %v1295 = vadd.f32 %v1275, %v1293
    %v1297 = vcombine.high %v1095, %v1095
    %v1299 = vunpack.c.l.s4 1983009808
    %v1300 = vunpack.c.0.s8 %v1299
    %v1301 = vlaneseq
    %v1302 = vshrl.u32 %v1301, 7
    %v1303 = vsub.s32 %v1300, %v1302
    %v1304 = vrot.slane %v1095, %v1303
    %v1306 = vunpack.c.l.s4 1983009808
    %v1307 = vunpack.c.0.s8 %v1306
    %v1308 = vlaneseq
    %v1309 = vshrl.u32 %v1308, 7
    %v1310 = vsub.s32 %v1307, %v1309
    %v1311 = vrot.slane %v1297, %v1310
    %v1312 = vcombine.high %v1304, %v1304
    %1313 = vrot.lane.b32.xlu0 %v1304, 17
    %v1314 = vpop.permute.xlu0 %1313
    %1315 = vrot.lane.b32.xlu0 %v1312, 17
    %v1316 = vpop.permute.xlu0 %1315
    %1317 = vrot.lane.b32.xlu0 %v1311, 17
    %v1318 = vpop.permute.xlu0 %1317
    %v1319 = vsel %vm808, %v1314, %v1316
    %v1320 = vsel %vm808, %v1316, %v1318
    %v1323 = vsel %vm783, %v1319, 0.0
    %v1324 = vsel %vm784, %v1320, 0.0
    %v1326 = vcombine.high %v1285, %v1285
    %v1328 = vunpack.c.l.s4 1983009808
    %v1329 = vunpack.c.0.s8 %v1328
    %v1330 = vlaneseq
    %v1331 = vshrl.u32 %v1330, 7
    %v1332 = vsub.s32 %v1329, %v1331
    %v1333 = vrot.slane %v1285, %v1332
    %v1335 = vunpack.c.l.s4 1983009808
    %v1336 = vunpack.c.0.s8 %v1335
    %v1337 = vlaneseq
    %v1338 = vshrl.u32 %v1337, 7
    %v1339 = vsub.s32 %v1336, %v1338
    %v1340 = vrot.slane %v1326, %v1339
    %v1341 = vcombine.high %v1333, %v1333
    %1342 = vrot.lane.b32.xlu0 %v1333, 15
    %v1343 = vpop.permute.xlu0 %1342
    %1344 = vrot.lane.b32.xlu0 %v1341, 15
    %v1345 = vpop.permute.xlu0 %1344
    %1346 = vrot.lane.b32.xlu0 %v1340, 15
    %v1347 = vpop.permute.xlu0 %1346
    %v1348 = vsel %vm848, %v1343, %v1345
    %v1349 = vsel %vm848, %v1345, %v1347
    %v1352 = vsel %vm823, %v1348, 0.0
    %v1353 = vsel %vm824, %v1349, 0.0
    %s1354 = sld [smem:[#allocation11]]
    %v1356 = vcombine.high %v1191, %v1191
    %v1358 = vunpack.c.l.s4 1983009808
    %v1359 = vunpack.c.0.s8 %v1358
    %v1360 = vlaneseq
    %v1361 = vshrl.u32 %v1360, 7
    %v1362 = vsub.s32 %v1359, %v1361
    %v1363 = vrot.slane %v1191, %v1362
    %v1365 = vunpack.c.l.s4 1983009808
    %v1366 = vunpack.c.0.s8 %v1365
    %v1367 = vlaneseq
    %v1368 = vshrl.u32 %v1367, 7
    %v1369 = vsub.s32 %v1366, %v1368
    %v1370 = vrot.slane %v1356, %v1369
    %v1371 = vcombine.high %v1363, %v1363
    %1372 = vrot.lane.b32.xlu0 %v1363, 16
    %v1373 = vpop.permute.xlu0 %1372
    %1374 = vrot.lane.b32.xlu0 %v1371, 16
    %v1375 = vpop.permute.xlu0 %1374
    %1376 = vrot.lane.b32.xlu0 %v1370, 16
    %v1377 = vpop.permute.xlu0 %1376
    %v1378 = vsel %vm879, %v1373, %v1375
    %v1379 = vsel %vm879, %v1375, %v1377
    %v1382 = vadd.f32 %v1323, %v1378
    %v1383 = vadd.f32 %v1324, %v1379
    %v1384 = vadd.f32 %v1382, %v1352
    %v1385 = vadd.f32 %v1383, %v1353
    %v1386 = vstv %s1354
    %v1387 = vadd.f32 %v1386, %v1384
    %v1388 = vadd.f32 %v1386, %v1385
    %v1390 = vcombine.high %v1105, %v1105
    %v1392 = vunpack.c.l.s4 1983009808
    %v1393 = vunpack.c.0.s8 %v1392
    %v1394 = vlaneseq
    %v1395 = vshrl.u32 %v1394, 7
    %v1396 = vsub.s32 %v1393, %v1395
    %v1397 = vrot.slane %v1105, %v1396
    %v1399 = vunpack.c.l.s4 1983009808
    %v1400 = vunpack.c.0.s8 %v1399
    %v1401 = vlaneseq
    %v1402 = vshrl.u32 %v1401, 7
    %v1403 = vsub.s32 %v1400, %v1402
    %v1404 = vrot.slane %v1390, %v1403
    %v1405 = vcombine.high %v1397, %v1397
    %1406 = vrot.lane.b32.xlu0 %v1397, 17
    %v1407 = vpop.permute.xlu0 %1406
    %1408 = vrot.lane.b32.xlu0 %v1405, 17
    %v1409 = vpop.permute.xlu0 %1408
    %1410 = vrot.lane.b32.xlu0 %v1404, 17
    %v1411 = vpop.permute.xlu0 %1410
    %v1412 = vsel %vm808, %v1407, %v1409
    %v1413 = vsel %vm808, %v1409, %v1411
    %v1416 = vsel %vm783, %v1412, 0.0
    %v1417 = vsel %vm784, %v1413, 0.0
    %v1419 = vcombine.high %v1295, %v1295
    %v1421 = vunpack.c.l.s4 1983009808
    %v1422 = vunpack.c.0.s8 %v1421
    %v1423 = vlaneseq
    %v1424 = vshrl.u32 %v1423, 7
    %v1425 = vsub.s32 %v1422, %v1424
    %v1426 = vrot.slane %v1295, %v1425
    %v1428 = vunpack.c.l.s4 1983009808
    %v1429 = vunpack.c.0.s8 %v1428
    %v1430 = vlaneseq
    %v1431 = vshrl.u32 %v1430, 7
    %v1432 = vsub.s32 %v1429, %v1431
    %v1433 = vrot.slane %v1419, %v1432
    %v1434 = vcombine.high %v1426, %v1426
    %1435 = vrot.lane.b32.xlu0 %v1426, 15
    %v1436 = vpop.permute.xlu0 %1435
    %1437 = vrot.lane.b32.xlu0 %v1434, 15
    %v1438 = vpop.permute.xlu0 %1437
    %1439 = vrot.lane.b32.xlu0 %v1433, 15
    %v1440 = vpop.permute.xlu0 %1439
    %v1441 = vsel %vm848, %v1436, %v1438
    %v1442 = vsel %vm848, %v1438, %v1440
    %v1445 = vsel %vm823, %v1441, 0.0
    %v1446 = vsel %vm824, %v1442, 0.0
    %s1447 = sld [smem:[#allocation11 + $0x1]]
    %v1449 = vcombine.high %v1201, %v1201
    %v1451 = vunpack.c.l.s4 1983009808
    %v1452 = vunpack.c.0.s8 %v1451
    %v1453 = vlaneseq
    %v1454 = vshrl.u32 %v1453, 7
    %v1455 = vsub.s32 %v1452, %v1454
    %v1456 = vrot.slane %v1201, %v1455
    %v1458 = vunpack.c.l.s4 1983009808
    %v1459 = vunpack.c.0.s8 %v1458
    %v1460 = vlaneseq
    %v1461 = vshrl.u32 %v1460, 7
    %v1462 = vsub.s32 %v1459, %v1461
    %v1463 = vrot.slane %v1449, %v1462
    %v1464 = vcombine.high %v1456, %v1456
    %1465 = vrot.lane.b32.xlu0 %v1456, 16
    %v1466 = vpop.permute.xlu0 %1465
    %1467 = vrot.lane.b32.xlu0 %v1464, 16
    %v1468 = vpop.permute.xlu0 %1467
    %1469 = vrot.lane.b32.xlu0 %v1463, 16
    %v1470 = vpop.permute.xlu0 %1469
    %v1471 = vsel %vm879, %v1466, %v1468
    %v1472 = vsel %vm879, %v1468, %v1470
    %v1475 = vadd.f32 %v1416, %v1471
    %v1476 = vadd.f32 %v1417, %v1472
    %v1477 = vadd.f32 %v1475, %v1445
    %v1478 = vadd.f32 %v1476, %v1446
    %v1479 = vstv %s1447
    %v1480 = vadd.f32 %v1479, %v1477
    %v1481 = vadd.f32 %v1479, %v1478
    %s1482 = sld [smem:[#allocation13]]
    %v1483 = vstv %s1482
    %v1484 = vmul.f32 %v1483, %v1387
    %v1485 = vmul.f32 %v1483, %v1388
    %s1486 = sld [smem:[#allocation13 + $0x1]]
    %v1487 = vstv %s1486
    %v1488 = vmul.f32 %v1487, %v1480
    %v1489 = vmul.f32 %v1487, %v1481
    %s1490 = sld [smem:[#allocation14]]
    %v1491 = vadd.f32 %v1484, %v1488
    %v1492 = vadd.f32 %v1485, %v1489
    %v1493 = vstv %s1490
    %v1494 = vadd.f32 %v1493, %v1491
    %v1495 = vadd.f32 %v1493, %v1492
    %s1496 = sld [smem:[#allocation13 + $0x2]]
    %v1497 = vstv %s1496
    %v1498 = vmul.f32 %v1497, %v1387
    %v1499 = vmul.f32 %v1497, %v1388
    %s1500 = sld [smem:[#allocation13 + $0x3]]
    %v1501 = vstv %s1500
    %v1502 = vmul.f32 %v1501, %v1480
    %v1503 = vmul.f32 %v1501, %v1481
    %s1504 = sld [smem:[#allocation14 + $0x1]]
    %v1505 = vadd.f32 %v1498, %v1502
    %v1506 = vadd.f32 %v1499, %v1503
    %v1507 = vstv %s1504
    %v1508 = vadd.f32 %v1507, %v1505
    %v1509 = vadd.f32 %v1507, %v1506
    %v1510 = vmul.f32 %v1494, 0.125
    %v1511 = vmul.f32 %v1495, 0.125
    %v1512 = vmax.f32 %v1510, -1.0
    %v1513 = vmax.f32 %v1511, -1.0
    %v1514 = vmin.f32 %v1512, 1.0
    %v1515 = vmin.f32 %v1513, 1.0
    %v1518 = vcombine.low %v1514, %v1515
    %v1520 = vunpack.c.l.s4 1966171168
    %v1521 = vunpack.c.0.s8 %v1520
    %v1522 = vlaneseq
    %v1523 = vshrl.u32 %v1522, 7
    %v1524 = vsub.s32 %v1521, %v1523
    %v1525 = vrot.slane %v1518, %v1524
    %v1526 = vcombine.high %v1525, %v1525
    %v1528 = vunpack.c.l.s4 1966171168
    %v1529 = vunpack.c.0.s8 %v1528
    %v1530 = vlaneseq
    %v1531 = vshrl.u32 %v1530, 7
    %v1532 = vsub.s32 %v1529, %v1531
    %v1533 = vrot.slane %v1525, %v1532
    %v1535 = vunpack.c.l.s4 1966171168
    %v1536 = vunpack.c.0.s8 %v1535
    %v1537 = vlaneseq
    %v1538 = vshrl.u32 %v1537, 7
    %v1539 = vsub.s32 %v1536, %v1538
    %v1540 = vrot.slane %v1526, %v1539
    %v1543 = vlaneseq
    %vm1544 = vcmp.ge.s32.totalorder %v1543, 0
    %vm1545 = vcmp.lt.s32.totalorder %v1543, 256
    %vm1546 = vmand %vm1544, %vm1545
    %1547 = vst.msk [vmem:[#allocation16] ss:$2 sm:$0x3] %vm1546, %v1533
    %s1548 = scalar_lea.vmem [#allocation16], 4
    %1549 = vst.msk [vmem:[%s1548] ss:$2 sm:$0x3] %vm1546, %v1540
    %v1550 = vmul.f32 %v1508, 0.125
    %v1551 = vmul.f32 %v1509, 0.125
    %v1552 = vmax.f32 %v1550, -1.0
    %v1553 = vmax.f32 %v1551, -1.0
    %v1554 = vmin.f32 %v1552, 1.0
    %v1555 = vmin.f32 %v1553, 1.0
    %v1558 = vcombine.low %v1554, %v1555
    %v1560 = vunpack.c.l.s4 1966171168
    %v1561 = vunpack.c.0.s8 %v1560
    %v1562 = vlaneseq
    %v1563 = vshrl.u32 %v1562, 7
    %v1564 = vsub.s32 %v1561, %v1563
    %v1565 = vrot.slane %v1558, %v1564
    %v1566 = vcombine.high %v1565, %v1565
    %v1568 = vunpack.c.l.s4 1966171168
    %v1569 = vunpack.c.0.s8 %v1568
    %v1570 = vlaneseq
    %v1571 = vshrl.u32 %v1570, 7
    %v1572 = vsub.s32 %v1569, %v1571
    %v1573 = vrot.slane %v1565, %v1572
    %v1575 = vunpack.c.l.s4 1966171168
    %v1576 = vunpack.c.0.s8 %v1575
    %v1577 = vlaneseq
    %v1578 = vshrl.u32 %v1577, 7
    %v1579 = vsub.s32 %v1576, %v1578
    %v1580 = vrot.slane %v1566, %v1579
    %s1583 = scalar_lea.vmem [#allocation16], 1
    %1584 = vst.msk [vmem:[%s1583] ss:$2 sm:$0x3] %vm1546, %v1573
    %s1585 = scalar_lea.vmem [#allocation16], 5
    %1586 = vst.msk [vmem:[%s1585] ss:$2 sm:$0x3] %vm1546, %v1580
    // Predicated region
    $region58: #{tpu_custom_call.1} parent=1 // pred_check
      _
    $region59: #{tpu_custom_call.1} parent=1 // pred_check_branch
      %1588 = sbr.rel (0) target = $region61
    $region60: #{tpu_custom_call.1} parent=1 // pred_region
      %s1590 = ssub.s32 128, 128
      %1591 = vsyncadd [#allocation5], %s1590
      %s1592 = sshll.u32 [#allocation16], 4
      %s1593 = int_to_ptr.vmem [resolvable:$true] %s1592
      %1598 = dma.vmem_to_hbm [thread:$0]  %s1593, 128, %s7, [#allocation5], 64, 64, 4
    $region61: #{tpu_custom_call.1} parent=1 // pred_fallthru
      _
    // Predicated region
    $region62: #{tpu_custom_call.1} parent=1 // pred_check
      _
    $region63: #{tpu_custom_call.1} parent=1 // pred_check_branch
      %1600 = sbr.rel (0) target = $region65
    $region64: #{tpu_custom_call.1} parent=1 // pred_region
      %1601 = dma.done [#allocation5], 128
    $region65: #{tpu_custom_call.1} parent=1 // pred_fallthru
      _
    %1602 = vsyncpa [#allocation4], 1
    %1603 = vsyncpa [#allocation5], 1
    %1604 = vsyncpa [#allocation6], 1
    %1605 = vsyncpa [#allocation9], 1
    %1606 = vsyncpa [#allocation12], 1
    %1607 = vsyncpa [#allocation15], 1

</llo_original>
